<compile_context>
chip_gen: v7x
topology: tpu7x:2x2x1
jax: 0.10.0
libtpu: 0.0.40
codegen_flags: <defaults>
</compile_context>

<pallas_src>
import numpy as np
import jax
import jax.numpy as jnp
from jax.experimental import pallas as pl
from jax.experimental.pallas import tpu as pltpu

WINDOW_SIZE = 11
SIGMA = 1.5
PAD = WINDOW_SIZE // 2
C1 = 0.01 ** 2
C2 = 0.03 ** 2

_LANE = 128
_W_CHUNK = 256   # column block for the band-blocked W pass
_W_HALO = 128    # lane-aligned band halo (>= PAD) for the W pass


def _gaussian_1d(window_size=WINDOW_SIZE, sigma=SIGMA):
    x = np.arange(window_size, dtype=np.float64)
    g = np.exp(-((x - window_size // 2) ** 2) / (2.0 * sigma ** 2))
    return (g / g.sum()).astype(np.float32)


def _w_band_matrix(n):
    """Banded (n, n) matrix M with M[i, i+d] = g[d+PAD]; 1-D gaussian 'same'
    conv with zero padding along the last axis equals img @ M."""
    g = _gaussian_1d()
    m = np.zeros((n, n), dtype=np.float32)
    idx = np.arange(n)
    for k in range(WINDOW_SIZE):
        d = k - PAD
        i = idx[(idx + d >= 0) & (idx + d < n)]
        m[i, i + d] = g[k]
    return m


def _h_band_matrix(th, hb):
    """(th, th + 2*hb) band mapping the halo-extended row tile to the
    H-direction gaussian conv of its center rows (zero padding comes from the
    zero-masked halo rows / the clipped band at tiny H)."""
    g = _gaussian_1d()
    r_ext = th + 2 * hb
    m = np.zeros((th, r_ext), dtype=np.float32)
    for r in range(th):
        for k in range(WINDOW_SIZE):
            c = r + hb + k - PAD
            if 0 <= c < r_ext:
                m[r, c] = g[k]
    return m


def _w_chunk_plan(w):
    """Lane-aligned column chunks (in_lo, in_hi, out_lo, out_hi) for the band-
    blocked W pass.  Single chunk == the plain dense-band matmul."""
    if w % _W_CHUNK != 0 or w <= _W_CHUNK:
        return ((0, w, 0, w),)
    plan = []
    for j in range(w // _W_CHUNK):
        c0, c1 = j * _W_CHUNK, (j + 1) * _W_CHUNK
        plan.append((max(c0 - _W_HALO, 0), min(c1 + _W_HALO, w), c0, c1))
    return tuple(plan)


def _make_kernel(r_ext, w_chunks):
    def kernel(pc_ref, pt_ref, pb_ref, tc_ref, tt_ref, tb_ref, w_ref,
               mh_ref, mw_ref, mse_ref, ssim_ref):
        h = pl.program_id(2)
        top_on = (h > 0).astype(jnp.float32)
        bot_on = (h < pl.num_programs(2) - 1).astype(jnp.float32)

        xc = pc_ref[0, 0]            # (TH, W) center rows of pred
        yc = tc_ref[0, 0]            # (TH, W) center rows of target
        w = w_ref[0]                 # (TH, W) weight

        # ---- weighted squared-error partial sum (raw center tile) ----
        d = xc - yc
        mse_part = jnp.sum(d * d * w)

        # ---- halo-extended row tile (halo zero-masked at image boundary,
        #      reproducing the zero 'same' padding of the reference conv) ----
        xt = pt_ref[0, 0] * top_on
        xb = pb_ref[0, 0] * bot_on
        yt = tt_ref[0, 0] * top_on
        yb = tb_ref[0, 0] * bot_on
        x = jnp.concatenate([xt, xc, xb], axis=0)     # (r_ext, W)
        y = jnp.concatenate([yt, yc, yb], axis=0)     # (r_ext, W)

        mh = mh_ref[...]                               # (TH, r_ext) band
        mw = mw_ref[...]                               # (W, W) band

        # 4 conv inputs (review #1) stacked along rows so the W pass is a
        # single, well-filled MXU matmul (review #6).
        conv_in = jnp.concatenate([x, y, x * x + y * y, x * y], axis=0)

        # W pass: band-blocked matmul over lane-aligned column chunks.
        outs = []
        for lo, hi, c0, c1 in w_chunks:
            outs.append(jnp.dot(conv_in[:, lo:hi], mw[lo:hi, c0:c1],
                                preferred_element_type=jnp.float32))
        t = outs[0] if len(outs) == 1 else jnp.concatenate(outs, axis=1)

        # H pass: small constant band (TH, r_ext) against each conv input.
        mu1 = jnp.dot(mh, t[0 * r_ext:1 * r_ext], preferred_element_type=jnp.float32)
        mu2 = jnp.dot(mh, t[1 * r_ext:2 * r_ext], preferred_element_type=jnp.float32)
        s_pp = jnp.dot(mh, t[2 * r_ext:3 * r_ext], preferred_element_type=jnp.float32)
        s_xy = jnp.dot(mh, t[3 * r_ext:4 * r_ext], preferred_element_type=jnp.float32)

        mu1_sq = mu1 * mu1
        mu2_sq = mu2 * mu2
        mu1_mu2 = mu1 * mu2
        sigma_sum = s_pp - mu1_sq - mu2_sq      # sigma1_sq + sigma2_sq
        sigma12 = s_xy - mu1_mu2

        num = (2.0 * mu1_mu2 + C1) * (2.0 * sigma12 + C2)
        den = (mu1_sq + mu2_sq + C1) * (sigma_sum + C2)
        r = pl.reciprocal(den, approx=True)      # EUP slot (review #7)
        r = r * (2.0 - den * r)                  # one Newton-Raphson refinement
        ssim_part = jnp.sum(num * r * w)

        # One (1, 128) lane-dense block per output per grid step (review #8).
        mse_ref[...] = jnp.full(mse_ref.shape, mse_part, dtype=jnp.float32)
        ssim_ref[...] = jnp.full(ssim_ref.shape, ssim_part, dtype=jnp.float32)

    return kernel


def _vmem_footprint_bytes(th, hb, w_dim):
    """Rough per-grid-step VMEM estimate (double-buffered inputs + f32
    intermediates + outputs)."""
    r_ext = th + 2 * hb
    per_buf_elems = (2 * r_ext + th) * w_dim + th * r_ext + w_dim * w_dim
    in_bytes = 2 * per_buf_elems * 4                 # double-buffered pipeline
    inter_bytes = (10 * r_ext + 12 * th) * w_dim * 4  # x/y ext, conv stack, maps
    out_bytes = 4 * 8 * _LANE * 4
    return in_bytes + inter_bytes + out_bytes


def _vmem_capacity_bytes():
    try:
        return int(pltpu.get_tpu_info().vmem_capacity_bytes)
    except Exception:
        return 64 * 1024 * 1024   # conservative: v7x physical VMEM per core


def _pick_row_tile(h, w_dim, vmem_cap):
    """Largest row tile whose footprint fits the VMEM budget (review #3, #4)."""
    hb = 8 if h >= 8 else h
    budget = int(0.55 * vmem_cap)
    cands = [h] + [t for t in (256, 128, 64, 32, 16, 8) if t < h and h % t == 0]
    for th in cands:
        if _vmem_footprint_bytes(th, hb, w_dim) <= budget:
            return th, hb
    return cands[-1], hb


def rgb_loss(pred, target, weight, lambda_val=0.7):
    B, C, H, W = pred.shape
    vmem_cap = _vmem_capacity_bytes()
    TH, HB = _pick_row_tile(H, W, vmem_cap)
    NH = H // TH
    R_EXT = TH + 2 * HB
    RB = max(TH // HB, 1)                 # TH-tile size in units of HB-blocks
    NB8 = max(-(-H // HB), 1)             # number of HB-row blocks in H

    mh = jnp.asarray(_h_band_matrix(TH, HB))
    mw = jnp.asarray(_w_band_matrix(W))
    w_chunks = _w_chunk_plan(W)
    kernel = _make_kernel(R_EXT, w_chunks)

    def center_map(b, c, h):
        return (b, c, h, 0)

    def top_map(b, c, h):        # 8-row block just above the tile (clamped)
        return (b, c, jnp.maximum(h * RB - 1, 0), 0)

    def bot_map(b, c, h):        # 8-row block just below the tile (clamped)
        return (b, c, jnp.minimum((h + 1) * RB, NB8 - 1), 0)

    grid_spec = pltpu.PrefetchScalarGridSpec(
        num_scalar_prefetch=0,
        grid=(B, C, NH),
        in_specs=[
            pl.BlockSpec((1, 1, TH, W), center_map),               # pred center
            pl.BlockSpec((1, 1, HB, W), top_map),                  # pred top halo
            pl.BlockSpec((1, 1, HB, W), bot_map),                  # pred bottom halo
            pl.BlockSpec((1, 1, TH, W), center_map),               # target center
            pl.BlockSpec((1, 1, HB, W), top_map),                  # target top halo
            pl.BlockSpec((1, 1, HB, W), bot_map),                  # target bottom halo
            pl.BlockSpec((1, TH, W), lambda b, c, h: (b, h, 0)),   # weight
            pl.BlockSpec((TH, R_EXT), lambda b, c, h: (0, 0)),     # Mh (grid-invariant)
            pl.BlockSpec((W, W), lambda b, c, h: (0, 0)),          # Mw (grid-invariant)
        ],
        out_specs=[
            pl.BlockSpec((1, 1, 1, _LANE), lambda b, c, h: (b, c * NH + h, 0, 0)),
            pl.BlockSpec((1, 1, 1, _LANE), lambda b, c, h: (b, c * NH + h, 0, 0)),
        ],
    )

    footprint = _vmem_footprint_bytes(TH, HB, W)
    vmem_limit = min(int(0.9 * vmem_cap),
                     max(32 * 1024 * 1024, int(1.25 * footprint) + (8 << 20)))

    mse_parts, ssim_parts = pl.pallas_call(
        kernel,
        out_shape=(jax.ShapeDtypeStruct((B, C * NH, 1, _LANE), jnp.float32),
                   jax.ShapeDtypeStruct((B, C * NH, 1, _LANE), jnp.float32)),
        grid_spec=grid_spec,
        compiler_params=pltpu.CompilerParams(
            dimension_semantics=("parallel", "parallel", "parallel"),
            vmem_limit_bytes=vmem_limit),
    )(pred, pred, pred, target, target, target, weight, mh, mw)

    mse_sum = jnp.sum(mse_parts[:, :, 0, 0])
    ssim_w_sum = jnp.sum(ssim_parts[:, :, 0, 0])
    w_sum = jnp.sum(weight)

    n_full = B * C * H * W
    mse_loss = mse_sum / n_full
    # mean_{b,h,w} (1 - mean_c ssim) * w == sum(w)/(B*H*W) - sum(ssim*w)/(B*C*H*W)
    ssim_loss = w_sum / (B * H * W) - ssim_w_sum / n_full
    return lambda_val * mse_loss + (1.0 - lambda_val) * ssim_loss


def rgb_loss_reference(pred, target, weight, lambda_val=0.7):
    """Pure-JAX reference mirroring the PyTorch RGBLoss forward."""
    B, C, H, W = pred.shape
    g = jnp.asarray(_gaussian_1d())
    win2d = jnp.outer(g, g)                                  # (11, 11)
    kern = jnp.broadcast_to(win2d, (C, 1, WINDOW_SIZE, WINDOW_SIZE))

    def dconv(img):
        return jax.lax.conv_general_dilated(
            img, kern, window_strides=(1, 1),
            padding=((PAD, PAD), (PAD, PAD)),
            dimension_numbers=("NCHW", "OIHW", "NCHW"),
            feature_group_count=C)

    mse = (pred - target) ** 2 * weight[:, None, :, :]
    mse_loss = jnp.mean(mse)

    mu1, mu2 = dconv(pred), dconv(target)
    mu1_sq, mu2_sq, mu1_mu2 = mu1 * mu1, mu2 * mu2, mu1 * mu2
    sigma1_sq = dconv(pred * pred) - mu1_sq
    sigma2_sq = dconv(target * target) - mu2_sq
    sigma12 = dconv(pred * target) - mu1_mu2
    ssim_map = ((2.0 * mu1_mu2 + C1) * (2.0 * sigma12 + C2)) / (
        (mu1_sq + mu2_sq + C1) * (sigma1_sq + sigma2_sq + C2))
    ssim_loss = jnp.mean((1.0 - jnp.mean(ssim_map, axis=1)) * weight)
    return lambda_val * mse_loss + (1.0 - lambda_val) * ssim_loss


if __name__ == "__main__":
    key = jax.random.PRNGKey(0)
    k1, k2, k3 = jax.random.split(key, 3)
    B, Cc, H, W = 2, 3, 16, 16
    pred = jax.random.uniform(k1, (B, Cc, H, W), dtype=jnp.float32)
    target = jax.random.uniform(k2, (B, Cc, H, W), dtype=jnp.float32)
    weight = jax.random.uniform(k3, (B, H, W), dtype=jnp.float32)

    loss = jax.block_until_ready(rgb_loss(pred, target, weight, lambda_val=0.7))
    ref = jax.block_until_ready(rgb_loss_reference(pred, target, weight, 0.7))

    np.testing.assert_allclose(np.asarray(loss), np.asarray(ref),
                               rtol=1e-4, atol=2e-5)
    print("KERNEL_OK")
</pallas_src>

<mosaic_0001>
module attributes {stable_mosaic.version = 11 : i64} {
  func.func @kernel(%arg0: i32, %arg1: i32, %arg2: i32, %arg3: memref<1x1x16x16xf32, #tpu.memory_space<vmem>>, %arg4: memref<1x1x8x16xf32, #tpu.memory_space<vmem>>, %arg5: memref<1x1x8x16xf32, #tpu.memory_space<vmem>>, %arg6: memref<1x1x16x16xf32, #tpu.memory_space<vmem>>, %arg7: memref<1x1x8x16xf32, #tpu.memory_space<vmem>>, %arg8: memref<1x1x8x16xf32, #tpu.memory_space<vmem>>, %arg9: memref<1x16x16xf32, #tpu.memory_space<vmem>>, %arg10: memref<16x32xf32, #tpu.memory_space<vmem>>, %arg11: memref<16x16xf32, #tpu.memory_space<vmem>>, %arg12: memref<1x1x1x128xf32, #tpu.memory_space<vmem>>, %arg13: memref<1x1x1x128xf32, #tpu.memory_space<vmem>>) attributes {dimension_semantics = [#tpu.dimension_semantics<parallel>, #tpu.dimension_semantics<parallel>, #tpu.dimension_semantics<parallel>], iteration_bounds = array<i64: 2, 3, 1>, scalar_prefetch = 0 : i64, scratch_operands = 0 : i64, tpu.core_type = #tpu.core_type<tc>, window_params = [{transform_indices = @transform_0, window_bounds = array<i64: 1, 1, 16, 16>}, {transform_indices = @transform_1, window_bounds = array<i64: 1, 1, 8, 16>}, {transform_indices = @transform_2, window_bounds = array<i64: 1, 1, 8, 16>}, {transform_indices = @transform_3, window_bounds = array<i64: 1, 1, 16, 16>}, {transform_indices = @transform_4, window_bounds = array<i64: 1, 1, 8, 16>}, {transform_indices = @transform_5, window_bounds = array<i64: 1, 1, 8, 16>}, {transform_indices = @transform_6, window_bounds = array<i64: 1, 16, 16>}, {pipeline_mode = #tpu.pipeline_mode<synchronous>, transform_indices = @transform_7, window_bounds = array<i64: 16, 32>}, {pipeline_mode = #tpu.pipeline_mode<synchronous>, transform_indices = @transform_8, window_bounds = array<i64: 16, 16>}, {transform_indices = @transform_9, window_bounds = array<i64: 1, 1, 1, 128>}, {transform_indices = @transform_10, window_bounds = array<i64: 1, 1, 1, 128>}]} {
    %c0_i32 = arith.constant 0 : i32
    %0 = arith.cmpi sgt, %arg2, %c0_i32 : i32
    %1 = arith.extui %0 : i1 to i32
    %2 = arith.sitofp %1 : i32 to f32
    %c0_i32_0 = arith.constant 0 : i32
    %3 = arith.cmpi slt, %arg2, %c0_i32_0 : i32
    %4 = arith.extui %3 : i1 to i32
    %5 = arith.sitofp %4 : i32 to f32
    %c0 = arith.constant 0 : index
    %c0_1 = arith.constant 0 : index
    %c0_2 = arith.constant 0 : index
    %c0_3 = arith.constant 0 : index
    %6 = vector.load %arg3[%c0, %c0_1, %c0_2, %c0_3] : memref<1x1x16x16xf32, #tpu.memory_space<vmem>>, vector<1x1x16x16xf32>
    %7 = vector.shape_cast %6 : vector<1x1x16x16xf32> to vector<16x16xf32>
    %c0_4 = arith.constant 0 : index
    %c0_5 = arith.constant 0 : index
    %c0_6 = arith.constant 0 : index
    %c0_7 = arith.constant 0 : index
    %8 = vector.load %arg6[%c0_4, %c0_5, %c0_6, %c0_7] : memref<1x1x16x16xf32, #tpu.memory_space<vmem>>, vector<1x1x16x16xf32>
    %9 = vector.shape_cast %8 : vector<1x1x16x16xf32> to vector<16x16xf32>
    %c0_8 = arith.constant 0 : index
    %c0_9 = arith.constant 0 : index
    %c0_10 = arith.constant 0 : index
    %10 = vector.load %arg9[%c0_8, %c0_9, %c0_10] : memref<1x16x16xf32, #tpu.memory_space<vmem>>, vector<1x16x16xf32>
    %11 = vector.shape_cast %10 : vector<1x16x16xf32> to vector<16x16xf32>
    %12 = arith.subf %7, %9 : vector<16x16xf32>
    %13 = arith.mulf %12, %12 : vector<16x16xf32>
    %14 = arith.mulf %13, %11 : vector<16x16xf32>
    %15 = vector.shape_cast %14 : vector<16x16xf32> to vector<1x16x16xf32>
    %cst = arith.constant dense<0.000000e+00> : vector<1xf32>
    %16 = vector.multi_reduction <add>, %15, %cst [1, 2] : vector<1x16x16xf32> to vector<1xf32>
    %17 = vector.shape_cast %16 : vector<1xf32> to vector<1x1x1xf32>
    %18 = vector.extract %17[0, 0, 0] : f32 from vector<1x1x1xf32>
    %c0_11 = arith.constant 0 : index
    %c0_12 = arith.constant 0 : index
    %c0_13 = arith.constant 0 : index
    %c0_14 = arith.constant 0 : index
    %19 = vector.load %arg4[%c0_11, %c0_12, %c0_13, %c0_14] : memref<1x1x8x16xf32, #tpu.memory_space<vmem>>, vector<1x1x8x16xf32>
    %20 = vector.shape_cast %19 : vector<1x1x8x16xf32> to vector<8x16xf32>
    %21 = vector.broadcast %2 : f32 to vector<8x16xf32>
    %22 = arith.mulf %20, %21 : vector<8x16xf32>
    %c0_15 = arith.constant 0 : index
    %c0_16 = arith.constant 0 : index
    %c0_17 = arith.constant 0 : index
    %c0_18 = arith.constant 0 : index
    %23 = vector.load %arg5[%c0_15, %c0_16, %c0_17, %c0_18] : memref<1x1x8x16xf32, #tpu.memory_space<vmem>>, vector<1x1x8x16xf32>
    %24 = vector.shape_cast %23 : vector<1x1x8x16xf32> to vector<8x16xf32>
    %25 = vector.broadcast %5 : f32 to vector<8x16xf32>
    %26 = arith.mulf %24, %25 : vector<8x16xf32>
    %c0_19 = arith.constant 0 : index
    %c0_20 = arith.constant 0 : index
    %c0_21 = arith.constant 0 : index
    %c0_22 = arith.constant 0 : index
    %27 = vector.load %arg7[%c0_19, %c0_20, %c0_21, %c0_22] : memref<1x1x8x16xf32, #tpu.memory_space<vmem>>, vector<1x1x8x16xf32>
    %28 = vector.shape_cast %27 : vector<1x1x8x16xf32> to vector<8x16xf32>
    %29 = vector.broadcast %2 : f32 to vector<8x16xf32>
    %30 = arith.mulf %28, %29 : vector<8x16xf32>
    %c0_23 = arith.constant 0 : index
    %c0_24 = arith.constant 0 : index
    %c0_25 = arith.constant 0 : index
    %c0_26 = arith.constant 0 : index
    %31 = vector.load %arg8[%c0_23, %c0_24, %c0_25, %c0_26] : memref<1x1x8x16xf32, #tpu.memory_space<vmem>>, vector<1x1x8x16xf32>
    %32 = vector.shape_cast %31 : vector<1x1x8x16xf32> to vector<8x16xf32>
    %33 = vector.broadcast %5 : f32 to vector<8x16xf32>
    %34 = arith.mulf %32, %33 : vector<8x16xf32>
    %35 = tpu.concatenate %22, %7, %26 in 0 : vector<8x16xf32>, vector<16x16xf32>, vector<8x16xf32> -> vector<32x16xf32>
    %36 = tpu.concatenate %30, %9, %34 in 0 : vector<8x16xf32>, vector<16x16xf32>, vector<8x16xf32> -> vector<32x16xf32>
    %c0_27 = arith.constant 0 : index
    %c0_28 = arith.constant 0 : index
    %37 = vector.load %arg10[%c0_27, %c0_28] : memref<16x32xf32, #tpu.memory_space<vmem>>, vector<16x32xf32>
    %c0_29 = arith.constant 0 : index
    %c0_30 = arith.constant 0 : index
    %38 = vector.load %arg11[%c0_29, %c0_30] : memref<16x16xf32, #tpu.memory_space<vmem>>, vector<16x16xf32>
    %39 = arith.mulf %35, %35 : vector<32x16xf32>
    %40 = arith.mulf %36, %36 : vector<32x16xf32>
    %41 = arith.addf %39, %40 : vector<32x16xf32>
    %42 = arith.mulf %35, %36 : vector<32x16xf32>
    %43 = tpu.concatenate %35, %36, %41, %42 in 0 : vector<32x16xf32>, vector<32x16xf32>, vector<32x16xf32>, vector<32x16xf32> -> vector<128x16xf32>
    %cst_31 = arith.constant dense<0.000000e+00> : vector<128x16xf32>
    %44 = tpu.matmul %43, %38, %cst_31 {dimension_numbers = #tpu.dot_dimension_numbers<[1], [0], [0], [1], [0, 0, 1, 1], [], []>} : vector<128x16xf32>, vector<16x16xf32>, vector<128x16xf32> -> vector<128x16xf32>
    %45 = vector.extract_strided_slice %44 {offsets = [0, 0], sizes = [32, 16], strides = [1, 1]} : vector<128x16xf32> to vector<32x16xf32>
    %cst_32 = arith.constant dense<0.000000e+00> : vector<16x16xf32>
    %46 = tpu.matmul %37, %45, %cst_32 {dimension_numbers = #tpu.dot_dimension_numbers<[1], [0], [0], [1], [0, 0, 1, 1], [], []>} : vector<16x32xf32>, vector<32x16xf32>, vector<16x16xf32> -> vector<16x16xf32>
    %47 = vector.extract_strided_slice %44 {offsets = [32, 0], sizes = [32, 16], strides = [1, 1]} : vector<128x16xf32> to vector<32x16xf32>
    %cst_33 = arith.constant dense<0.000000e+00> : vector<16x16xf32>
    %48 = tpu.matmul %37, %47, %cst_33 {dimension_numbers = #tpu.dot_dimension_numbers<[1], [0], [0], [1], [0, 0, 1, 1], [], []>} : vector<16x32xf32>, vector<32x16xf32>, vector<16x16xf32> -> vector<16x16xf32>
    %49 = vector.extract_strided_slice %44 {offsets = [64, 0], sizes = [32, 16], strides = [1, 1]} : vector<128x16xf32> to vector<32x16xf32>
    %cst_34 = arith.constant dense<0.000000e+00> : vector<16x16xf32>
    %50 = tpu.matmul %37, %49, %cst_34 {dimension_numbers = #tpu.dot_dimension_numbers<[1], [0], [0], [1], [0, 0, 1, 1], [], []>} : vector<16x32xf32>, vector<32x16xf32>, vector<16x16xf32> -> vector<16x16xf32>
    %51 = vector.extract_strided_slice %44 {offsets = [96, 0], sizes = [32, 16], strides = [1, 1]} : vector<128x16xf32> to vector<32x16xf32>
    %cst_35 = arith.constant dense<0.000000e+00> : vector<16x16xf32>
    %52 = tpu.matmul %37, %51, %cst_35 {dimension_numbers = #tpu.dot_dimension_numbers<[1], [0], [0], [1], [0, 0, 1, 1], [], []>} : vector<16x32xf32>, vector<32x16xf32>, vector<16x16xf32> -> vector<16x16xf32>
    %53 = arith.mulf %46, %46 : vector<16x16xf32>
    %54 = arith.mulf %48, %48 : vector<16x16xf32>
    %55 = arith.mulf %46, %48 : vector<16x16xf32>
    %56 = arith.subf %50, %53 : vector<16x16xf32>
    %57 = arith.subf %56, %54 : vector<16x16xf32>
    %58 = arith.subf %52, %55 : vector<16x16xf32>
    %cst_36 = arith.constant 2.000000e+00 : f32
    %59 = vector.broadcast %cst_36 : f32 to vector<16x16xf32>
    %60 = arith.mulf %59, %55 : vector<16x16xf32>
    %cst_37 = arith.constant 9.99999974E-5 : f32
    %61 = vector.broadcast %cst_37 : f32 to vector<16x16xf32>
    %62 = arith.addf %60, %61 : vector<16x16xf32>
    %cst_38 = arith.constant 2.000000e+00 : f32
    %63 = vector.broadcast %cst_38 : f32 to vector<16x16xf32>
    %64 = arith.mulf %63, %58 : vector<16x16xf32>
    %cst_39 = arith.constant 8.99999984E-4 : f32
    %65 = vector.broadcast %cst_39 : f32 to vector<16x16xf32>
    %66 = arith.addf %64, %65 : vector<16x16xf32>
    %67 = arith.mulf %62, %66 : vector<16x16xf32>
    %68 = arith.addf %53, %54 : vector<16x16xf32>
    %cst_40 = arith.constant 9.99999974E-5 : f32
    %69 = vector.broadcast %cst_40 : f32 to vector<16x16xf32>
    %70 = arith.addf %68, %69 : vector<16x16xf32>
    %cst_41 = arith.constant 8.99999984E-4 : f32
    %71 = vector.broadcast %cst_41 : f32 to vector<16x16xf32>
    %72 = arith.addf %57, %71 : vector<16x16xf32>
    %73 = arith.mulf %70, %72 : vector<16x16xf32>
    %74 = tpu.reciprocal %73 {approx = true} : vector<16x16xf32> -> vector<16x16xf32>
    %75 = arith.mulf %73, %74 : vector<16x16xf32>
    %cst_42 = arith.constant 2.000000e+00 : f32
    %76 = vector.broadcast %cst_42 : f32 to vector<16x16xf32>
    %77 = arith.subf %76, %75 : vector<16x16xf32>
    %78 = arith.mulf %74, %77 : vector<16x16xf32>
    %79 = arith.mulf %67, %78 : vector<16x16xf32>
    %80 = arith.mulf %79, %11 : vector<16x16xf32>
    %81 = vector.shape_cast %80 : vector<16x16xf32> to vector<1x16x16xf32>
    %cst_43 = arith.constant dense<0.000000e+00> : vector<1xf32>
    %82 = vector.multi_reduction <add>, %81, %cst_43 [1, 2] : vector<1x16x16xf32> to vector<1xf32>
    %83 = vector.shape_cast %82 : vector<1xf32> to vector<1x1x1xf32>
    %84 = vector.extract %83[0, 0, 0] : f32 from vector<1x1x1xf32>
    %85 = vector.broadcast %18 : f32 to vector<1x1x1x128xf32>
    %c0_44 = arith.constant 0 : index
    %c0_45 = arith.constant 0 : index
    %c0_46 = arith.constant 0 : index
    %c0_47 = arith.constant 0 : index
    %86 = vector.load %arg12[%c0_44, %c0_45, %c0_46, %c0_47] : memref<1x1x1x128xf32, #tpu.memory_space<vmem>>, vector<1x1x1x128xf32>
    tpu.vector_store %arg12[%c0_44, %c0_45, %c0_46, %c0_47], %85 {strides = array<i32>} : memref<1x1x1x128xf32, #tpu.memory_space<vmem>>, vector<1x1x1x128xf32>,
    %87 = vector.broadcast %84 : f32 to vector<1x1x1x128xf32>
    %c0_48 = arith.constant 0 : index
    %c0_49 = arith.constant 0 : index
    %c0_50 = arith.constant 0 : index
    %c0_51 = arith.constant 0 : index
    %88 = vector.load %arg13[%c0_48, %c0_49, %c0_50, %c0_51] : memref<1x1x1x128xf32, #tpu.memory_space<vmem>>, vector<1x1x1x128xf32>
    tpu.vector_store %arg13[%c0_48, %c0_49, %c0_50, %c0_51], %87 {strides = array<i32>} : memref<1x1x1x128xf32, #tpu.memory_space<vmem>>, vector<1x1x1x128xf32>,
    return
  }
  func.func @transform_0(%arg0: i32, %arg1: i32, %arg2: i32) -> (i32, i32, i32, i32) {
    %c0_i32 = arith.constant 0 : i32
    %c0_i32_0 = arith.constant 0 : i32
    return %arg0, %arg1, %arg2, %c0_i32 : i32, i32, i32, i32
  }
  func.func @transform_1(%arg0: i32, %arg1: i32, %arg2: i32) -> (i32, i32, i32, i32) {
    %c2_i32 = arith.constant 2 : i32
    %0 = arith.muli %arg2, %c2_i32 : i32
    %c1_i32 = arith.constant 1 : i32
    %1 = arith.subi %0, %c1_i32 : i32
    %c0_i32 = arith.constant 0 : i32
    %2 = arith.maxsi %1, %c0_i32 : i32
    %c0_i32_0 = arith.constant 0 : i32
    %c0_i32_1 = arith.constant 0 : i32
    return %arg0, %arg1, %2, %c0_i32_0 : i32, i32, i32, i32
  }
  func.func @transform_2(%arg0: i32, %arg1: i32, %arg2: i32) -> (i32, i32, i32, i32) {
    %c1_i32 = arith.constant 1 : i32
    %0 = arith.addi %arg2, %c1_i32 : i32
    %c2_i32 = arith.constant 2 : i32
    %1 = arith.muli %0, %c2_i32 : i32
    %c1_i32_0 = arith.constant 1 : i32
    %2 = arith.minsi %1, %c1_i32_0 : i32
    %c0_i32 = arith.constant 0 : i32
    %c0_i32_1 = arith.constant 0 : i32
    return %arg0, %arg1, %2, %c0_i32 : i32, i32, i32, i32
  }
  func.func @transform_3(%arg0: i32, %arg1: i32, %arg2: i32) -> (i32, i32, i32, i32) {
    %c0_i32 = arith.constant 0 : i32
    %c0_i32_0 = arith.constant 0 : i32
    return %arg0, %arg1, %arg2, %c0_i32 : i32, i32, i32, i32
  }
  func.func @transform_4(%arg0: i32, %arg1: i32, %arg2: i32) -> (i32, i32, i32, i32) {
    %c2_i32 = arith.constant 2 : i32
    %0 = arith.muli %arg2, %c2_i32 : i32
    %c1_i32 = arith.constant 1 : i32
    %1 = arith.subi %0, %c1_i32 : i32
    %c0_i32 = arith.constant 0 : i32
    %2 = arith.maxsi %1, %c0_i32 : i32
    %c0_i32_0 = arith.constant 0 : i32
    %c0_i32_1 = arith.constant 0 : i32
    return %arg0, %arg1, %2, %c0_i32_0 : i32, i32, i32, i32
  }
  func.func @transform_5(%arg0: i32, %arg1: i32, %arg2: i32) -> (i32, i32, i32, i32) {
    %c1_i32 = arith.constant 1 : i32
    %0 = arith.addi %arg2, %c1_i32 : i32
    %c2_i32 = arith.constant 2 : i32
    %1 = arith.muli %0, %c2_i32 : i32
    %c1_i32_0 = arith.constant 1 : i32
    %2 = arith.minsi %1, %c1_i32_0 : i32
    %c0_i32 = arith.constant 0 : i32
    %c0_i32_1 = arith.constant 0 : i32
    return %arg0, %arg1, %2, %c0_i32 : i32, i32, i32, i32
  }
  func.func @transform_6(%arg0: i32, %arg1: i32, %arg2: i32) -> (i32, i32, i32) {
    %c0_i32 = arith.constant 0 : i32
    %c0_i32_0 = arith.constant 0 : i32
    return %arg0, %arg2, %c0_i32 : i32, i32, i32
  }
  func.func @transform_7(%arg0: i32, %arg1: i32, %arg2: i32) -> (i32, i32) {
    %c0_i32 = arith.constant 0 : i32
    %c0_i32_0 = arith.constant 0 : i32
    %c0_i32_1 = arith.constant 0 : i32
    return %c0_i32, %c0_i32_0 : i32, i32
  }
  func.func @transform_8(%arg0: i32, %arg1: i32, %arg2: i32) -> (i32, i32) {
    %c0_i32 = arith.constant 0 : i32
    %c0_i32_0 = arith.constant 0 : i32
    %c0_i32_1 = arith.constant 0 : i32
    return %c0_i32, %c0_i32_0 : i32, i32
  }
  func.func @transform_9(%arg0: i32, %arg1: i32, %arg2: i32) -> (i32, i32, i32, i32) {
    %c1_i32 = arith.constant 1 : i32
    %0 = arith.muli %arg1, %c1_i32 : i32
    %1 = arith.addi %0, %arg2 : i32
    %c0_i32 = arith.constant 0 : i32
    %c0_i32_0 = arith.constant 0 : i32
    %c0_i32_1 = arith.constant 0 : i32
    return %arg0, %1, %c0_i32, %c0_i32_0 : i32, i32, i32, i32
  }
  func.func @transform_10(%arg0: i32, %arg1: i32, %arg2: i32) -> (i32, i32, i32, i32) {
    %c1_i32 = arith.constant 1 : i32
    %0 = arith.muli %arg1, %c1_i32 : i32
    %1 = arith.addi %0, %arg2 : i32
    %c0_i32 = arith.constant 0 : i32
    %c0_i32_0 = arith.constant 0 : i32
    %c0_i32_1 = arith.constant 0 : i32
    return %arg0, %1, %c0_i32, %c0_i32_0 : i32, i32, i32, i32
  }
}

</mosaic_0001>

<llo_original>
// kernel: tpu_custom_call.1
$region0: #{tpu_custom_call.1}
  #allocation0 [shape = 'u32[]', space=smem, size = 0x4, offset = 0x4, fixed_abs, tag = 'smem constant byte address 0x4 - core index']
  #allocation1 [shape = 'u32[144,128]{1,0:T(1,128)}', space=vmem, size = 0x12000, scoped, tag = 'internal scratch']
  %s0 = inlined_call_operand.hbm [shape: f32[2,3,16,16], index: 0, kind: input, shape index: {}]
  %s1 = inlined_call_operand.hbm [shape: f32[2,3,16,16], index: 1, kind: input, shape index: {}]
  %s2 = inlined_call_operand.hbm [shape: f32[2,3,16,16], index: 2, kind: input, shape index: {}]
  %s3 = inlined_call_operand.hbm [shape: f32[2,3,16,16], index: 3, kind: input, shape index: {}]
  %s4 = inlined_call_operand.hbm [shape: f32[2,3,16,16], index: 4, kind: input, shape index: {}]
  %s5 = inlined_call_operand.hbm [shape: f32[2,3,16,16], index: 5, kind: input, shape index: {}]
  %s6 = inlined_call_operand.hbm [shape: f32[2,16,16], index: 6, kind: input, shape index: {}]
  %s7 = inlined_call_operand.vmem [shape: f32[16,32], index: 7, kind: input, shape index: {}]
  %s8 = inlined_call_operand.hbm [shape: f32[16,16], index: 8, kind: input, shape index: {}]
  %s9 = inlined_call_operand.hbm [shape: f32[2,3,1,128], index: 9, kind: output, shape index: {0}]
  %s10 = inlined_call_operand.hbm [shape: f32[2,3,1,128], index: 10, kind: output, shape index: {1}]
  %11 = xla_tuple %s9, %s10
  %s12 = sld [smem:[#allocation0]]
  $region109: #{tpu_custom_call.1} parent=0
    _
  %s14 = ssub.s32 1, %s12
  %s15 = scalar_select 0, %s14, %s12
  $region1: #{tpu_custom_call.1} parent=0
    #allocation2 [shape = 'u8[16384]{0}', space=vmem, size = 0x4000, scoped, tag = 'input window, operand 0']
    #allocation3 [shape = 's32[2]{0}', space=sflag, size = 0x8, scoped, tag = 'scoped memory for tpu_custom_call.1']
    #allocation4 [shape = 's32[2]{0}', space=sflag, size = 0x8, scoped, tag = 'scoped memory for tpu_custom_call.1']
    #allocation5 [shape = 'u8[8192]{0}', space=vmem, size = 0x2000, scoped, tag = 'input window, operand 1']
    #allocation6 [shape = 's32[2]{0}', space=sflag, size = 0x8, scoped, tag = 'scoped memory for tpu_custom_call.1']
    #allocation7 [shape = 'u8[8192]{0}', space=vmem, size = 0x2000, scoped, tag = 'input window, operand 2']
    #allocation8 [shape = 'u8[16384]{0}', space=vmem, size = 0x4000, scoped, tag = 'input window, operand 3']
    #allocation9 [shape = 's32[2]{0}', space=sflag, size = 0x8, scoped, tag = 'scoped memory for tpu_custom_call.1']
    #allocation10 [shape = 'u8[8192]{0}', space=vmem, size = 0x2000, scoped, tag = 'input window, operand 4']
    #allocation11 [shape = 'u8[8192]{0}', space=vmem, size = 0x2000, scoped, tag = 'input window, operand 5']
    #allocation12 [shape = 's32[2]{0}', space=sflag, size = 0x8, scoped, tag = 'scoped memory for tpu_custom_call.1']
    #allocation13 [shape = 'u8[16384]{0}', space=vmem, size = 0x4000, scoped, tag = 'input window, operand 6']
    #allocation14 [shape = 'u8[8192]{0}', space=vmem, size = 0x2000, scoped, tag = 'input window, operand 8, single buffered']
    #allocation15 [shape = 's32[1]{0}', space=sflag, size = 0x4, scoped, tag = 'scoped memory for tpu_custom_call.1']
    #allocation16 [shape = 'u8[1024]{0}', space=vmem, size = 0x400, scoped, tag = 'output window, operand 0']
    #allocation17 [shape = 'u8[1024]{0}', space=vmem, size = 0x400, scoped, tag = 'output window, operand 1']
    #allocation18 [shape = 's32[2]{0}', space=sflag, size = 0x8, scoped, tag = 'scoped memory for tpu_custom_call.1']
    %16 = vsyncpa [#allocation3], 0
    %s17 = scalar_lea.sflag [#allocation3], 1
    %18 = vsyncpa %s17, 0
    %19 = vsyncpa [#allocation6], 0
    %s20 = scalar_lea.sflag [#allocation6], 1
    %21 = vsyncpa %s20, 0
    %22 = vsyncpa [#allocation9], 0
    %s23 = scalar_lea.sflag [#allocation9], 1
    %24 = vsyncpa %s23, 0
    %25 = vsyncpa [#allocation12], 0
    %s26 = scalar_lea.sflag [#allocation12], 1
    %27 = vsyncpa %s26, 0
    %28 = vsyncpa [#allocation15], 0
    %29 = vsyncpa [#allocation4], 0
    %s30 = scalar_lea.sflag [#allocation4], 1
    %31 = vsyncpa %s30, 0
    %32 = vsyncpa [#allocation18], 0
    %s33 = scalar_lea.sflag [#allocation18], 1
    %34 = vsyncpa %s33, 0
    loop: start=0, step=1, limit=8
    $region2: #{tpu_custom_call.1} parent=1 // loop_pre_header
      _
    $region3: #{tpu_custom_call.1} parent=1 // loop_header
      %s36 = sphi 0, %s40
      %p37 = scmp.ge.s32.totalorder %s36, 8
      %s43 = sphi 0, %s62
      %s44 = sphi 0, %s58
      %s45 = sphi 0, %s54
      %s46 = sphi 0, %s43
      %s47 = sphi 0, %s44
      %s48 = sphi 0, %s45
      %s49 = sphi 0, %s46
      %s50 = sphi 0, %s47
      %s51 = sphi 0, %s48
      %s69 = sphi 0, %s71
      %s72 = sphi 0, %s69
      %s73 = sphi 0, %s72
      %s89 = sphi 0, %s73
      %s107 = sphi 0, %s109
      %s110 = sphi 0, %s107
      %s111 = sphi 0, %s110
      %s127 = sphi 0, %s111
      %s145 = sphi 0, %s147
      %s148 = sphi 0, %s145
      %s149 = sphi 0, %s148
      %s165 = sphi 0, %s149
      %s175 = sphi 0, %s177
      %s178 = sphi 0, %s175
      %s179 = sphi 0, %s178
      %s195 = sphi 0, %s179
      %s213 = sphi 0, %s215
      %s216 = sphi 0, %s213
      %s217 = sphi 0, %s216
      %s233 = sphi 0, %s217
      %s251 = sphi 0, %s253
      %s254 = sphi 0, %s251
      %s255 = sphi 0, %s254
      %s271 = sphi 0, %s255
      %s279 = sphi 0, %s281
      %s282 = sphi 0, %s279
      %s283 = sphi 0, %s282
      %s299 = sphi 0, %s283
      %s303 = sphi 0, %s303
      %s305 = sphi 0, %s303
      %s306 = sphi 0, %s305
      %s320 = sphi 0, %s306
      %s324 = sphi 0, %s324
      %s326 = sphi 0, %s324
      %s327 = sphi 0, %s326
      %s341 = sphi 0, %s327
      %s351 = sphi 0, %s353
      %s354 = sphi 0, %s351
      %s355 = sphi 0, %s354
      %s371 = sphi 0, %s355
      %s381 = sphi 0, %s383
      %s384 = sphi 0, %s381
      %s385 = sphi 0, %s384
      %s401 = sphi 0, %s385
    $region4: #{tpu_custom_call.1} parent=1 // loop_header_branch
      %39 = sbr.rel (%p37) target = $region8
    $region5: #{tpu_custom_call.1} parent=1 // loop_body
      %s41 = ssub.s32 %s36, 1
      %s42 = ssub.s32 %s36, 2
      %s52 = sadd.s32 1, %s45
      %p53 = scmp.ge.s32.totalorder %s52, 1
      %s54 = scalar_select %p53, 0, %s52
      %s55 = sadd.s32 1, %s44
      %s56 = scalar_select %p53, %s55, %s44
      %p57 = scmp.ge.s32.totalorder %s56, 3
      %s58 = scalar_select %p57, 0, %s56
      %s59 = sadd.s32 1, %s43
      %s60 = scalar_select %p57, %s59, %s43
      %p61 = scmp.ge.s32.totalorder %s60, 2
      %s62 = scalar_select %p61, 0, %s60
      %s63 = ssub.s32 %s43, %s62
      %s64 = ssub.s32 %s44, %s58
      %s65 = sor.u32 %s63, %s64
      %s66 = ssub.s32 %s45, %s54
      %s67 = sor.u32 %s65, %s66
      %p68 = scmp.eq.s32.totalorder %s67, 0
      %s70 = sadd.s32 %s69, 1
      %s71 = scalar_select %p68, %s69, %s70
      %p74 = pneg %p68
      %p75 = scmp.eq.s32.totalorder %s36, 5
      %p76 = por %p74, %p75
      %p77 = scmp.ne.s32.totalorder %s69, %s72
      %p78 = scmp.eq.s32.totalorder %s36, 0
      %p79 = por %p77, %p78
      %p80 = scmp.ne.s32.totalorder %s69, %s72
      %p81 = scmp.eq.s32.totalorder %s41, 5
      %p82 = por %p80, %p81
      %p83 = scmp.ne.s32.totalorder %s72, %s73
      %p84 = scmp.eq.s32.totalorder %s41, 0
      %p85 = por %p83, %p84
      %p86 = scmp.ne.s32.totalorder %s72, %s73
      %p87 = scmp.eq.s32.totalorder %s42, 5
      %p88 = por %p86, %p87
      %p90 = scmp.ne.s32.totalorder %s73, %s89
      %p91 = scmp.eq.s32.totalorder %s42, 0
      %p92 = por %p90, %p91
      %s93 = smul.u32 %s45, 2
      %s94 = ssub.s32 %s93, 1
      %p95 = scmp.gt.s32.totalorder %s94, 0
      %s96 = scalar_select %p95, %s94, 0
      %s97 = smul.u32 %s54, 2
      %s98 = ssub.s32 %s97, 1
      %p99 = scmp.gt.s32.totalorder %s98, 0
      %s100 = scalar_select %p99, %s98, 0
      %s101 = ssub.s32 %s43, %s62
      %s102 = ssub.s32 %s44, %s58
      %s103 = sor.u32 %s101, %s102
      %s104 = ssub.s32 %s96, %s100
      %s105 = sor.u32 %s103, %s104
      %p106 = scmp.eq.s32.totalorder %s105, 0
      %s108 = sadd.s32 %s107, 1
      %s109 = scalar_select %p106, %s107, %s108
      %p112 = pneg %p106
      %p113 = scmp.eq.s32.totalorder %s36, 5
      %p114 = por %p112, %p113
      %p115 = scmp.ne.s32.totalorder %s107, %s110
      %p116 = scmp.eq.s32.totalorder %s36, 0
      %p117 = por %p115, %p116
      %p118 = scmp.ne.s32.totalorder %s107, %s110
      %p119 = scmp.eq.s32.totalorder %s41, 5
      %p120 = por %p118, %p119
      %p121 = scmp.ne.s32.totalorder %s110, %s111
      %p122 = scmp.eq.s32.totalorder %s41, 0
      %p123 = por %p121, %p122
      %p124 = scmp.ne.s32.totalorder %s110, %s111
      %p125 = scmp.eq.s32.totalorder %s42, 5
      %p126 = por %p124, %p125
      %p128 = scmp.ne.s32.totalorder %s111, %s127
      %p129 = scmp.eq.s32.totalorder %s42, 0
      %p130 = por %p128, %p129
      %s131 = sadd.s32 %s45, 1
      %s132 = smul.u32 %s131, 2
      %p133 = scmp.lt.s32.totalorder %s132, 1
      %s134 = scalar_select %p133, %s132, 1
      %s135 = sadd.s32 %s54, 1
      %s136 = smul.u32 %s135, 2
      %p137 = scmp.lt.s32.totalorder %s136, 1
      %s138 = scalar_select %p137, %s136, 1
      %s139 = ssub.s32 %s43, %s62
      %s140 = ssub.s32 %s44, %s58
      %s141 = sor.u32 %s139, %s140
      %s142 = ssub.s32 %s134, %s138
      %s143 = sor.u32 %s141, %s142
      %p144 = scmp.eq.s32.totalorder %s143, 0
      %s146 = sadd.s32 %s145, 1
      %s147 = scalar_select %p144, %s145, %s146
      %p150 = pneg %p144
      %p151 = scmp.eq.s32.totalorder %s36, 5
      %p152 = por %p150, %p151
      %p153 = scmp.ne.s32.totalorder %s145, %s148
      %p154 = scmp.eq.s32.totalorder %s36, 0
      %p155 = por %p153, %p154
      %p156 = scmp.ne.s32.totalorder %s145, %s148
      %p157 = scmp.eq.s32.totalorder %s41, 5
      %p158 = por %p156, %p157
      %p159 = scmp.ne.s32.totalorder %s148, %s149
      %p160 = scmp.eq.s32.totalorder %s41, 0
      %p161 = por %p159, %p160
      %p162 = scmp.ne.s32.totalorder %s148, %s149
      %p163 = scmp.eq.s32.totalorder %s42, 5
      %p164 = por %p162, %p163
      %p166 = scmp.ne.s32.totalorder %s149, %s165
      %p167 = scmp.eq.s32.totalorder %s42, 0
      %p168 = por %p166, %p167
      %s169 = ssub.s32 %s43, %s62
      %s170 = ssub.s32 %s44, %s58
      %s171 = sor.u32 %s169, %s170
      %s172 = ssub.s32 %s45, %s54
      %s173 = sor.u32 %s171, %s172
      %p174 = scmp.eq.s32.totalorder %s173, 0
      %s176 = sadd.s32 %s175, 1
      %s177 = scalar_select %p174, %s175, %s176
      %p180 = pneg %p174
      %p181 = scmp.eq.s32.totalorder %s36, 5
      %p182 = por %p180, %p181
      %p183 = scmp.ne.s32.totalorder %s175, %s178
      %p184 = scmp.eq.s32.totalorder %s36, 0
      %p185 = por %p183, %p184
      %p186 = scmp.ne.s32.totalorder %s175, %s178
      %p187 = scmp.eq.s32.totalorder %s41, 5
      %p188 = por %p186, %p187
      %p189 = scmp.ne.s32.totalorder %s178, %s179
      %p190 = scmp.eq.s32.totalorder %s41, 0
      %p191 = por %p189, %p190
      %p192 = scmp.ne.s32.totalorder %s178, %s179
      %p193 = scmp.eq.s32.totalorder %s42, 5
      %p194 = por %p192, %p193
      %p196 = scmp.ne.s32.totalorder %s179, %s195
      %p197 = scmp.eq.s32.totalorder %s42, 0
      %p198 = por %p196, %p197
      %s199 = smul.u32 %s45, 2
      %s200 = ssub.s32 %s199, 1
      %p201 = scmp.gt.s32.totalorder %s200, 0
      %s202 = scalar_select %p201, %s200, 0
      %s203 = smul.u32 %s54, 2
      %s204 = ssub.s32 %s203, 1
      %p205 = scmp.gt.s32.totalorder %s204, 0
      %s206 = scalar_select %p205, %s204, 0
      %s207 = ssub.s32 %s43, %s62
      %s208 = ssub.s32 %s44, %s58
      %s209 = sor.u32 %s207, %s208
      %s210 = ssub.s32 %s202, %s206
      %s211 = sor.u32 %s209, %s210
      %p212 = scmp.eq.s32.totalorder %s211, 0
      %s214 = sadd.s32 %s213, 1
      %s215 = scalar_select %p212, %s213, %s214
      %p218 = pneg %p212
      %p219 = scmp.eq.s32.totalorder %s36, 5
      %p220 = por %p218, %p219
      %p221 = scmp.ne.s32.totalorder %s213, %s216
      %p222 = scmp.eq.s32.totalorder %s36, 0
      %p223 = por %p221, %p222
      %p224 = scmp.ne.s32.totalorder %s213, %s216
      %p225 = scmp.eq.s32.totalorder %s41, 5
      %p226 = por %p224, %p225
      %p227 = scmp.ne.s32.totalorder %s216, %s217
      %p228 = scmp.eq.s32.totalorder %s41, 0
      %p229 = por %p227, %p228
      %p230 = scmp.ne.s32.totalorder %s216, %s217
      %p231 = scmp.eq.s32.totalorder %s42, 5
      %p232 = por %p230, %p231
      %p234 = scmp.ne.s32.totalorder %s217, %s233
      %p235 = scmp.eq.s32.totalorder %s42, 0
      %p236 = por %p234, %p235
      %s237 = sadd.s32 %s45, 1
      %s238 = smul.u32 %s237, 2
      %p239 = scmp.lt.s32.totalorder %s238, 1
      %s240 = scalar_select %p239, %s238, 1
      %s241 = sadd.s32 %s54, 1
      %s242 = smul.u32 %s241, 2
      %p243 = scmp.lt.s32.totalorder %s242, 1
      %s244 = scalar_select %p243, %s242, 1
      %s245 = ssub.s32 %s43, %s62
      %s246 = ssub.s32 %s44, %s58
      %s247 = sor.u32 %s245, %s246
      %s248 = ssub.s32 %s240, %s244
      %s249 = sor.u32 %s247, %s248
      %p250 = scmp.eq.s32.totalorder %s249, 0
      %s252 = sadd.s32 %s251, 1
      %s253 = scalar_select %p250, %s251, %s252
      %p256 = pneg %p250
      %p257 = scmp.eq.s32.totalorder %s36, 5
      %p258 = por %p256, %p257
      %p259 = scmp.ne.s32.totalorder %s251, %s254
      %p260 = scmp.eq.s32.totalorder %s36, 0
      %p261 = por %p259, %p260
      %p262 = scmp.ne.s32.totalorder %s251, %s254
      %p263 = scmp.eq.s32.totalorder %s41, 5
      %p264 = por %p262, %p263
      %p265 = scmp.ne.s32.totalorder %s254, %s255
      %p266 = scmp.eq.s32.totalorder %s41, 0
      %p267 = por %p265, %p266
      %p268 = scmp.ne.s32.totalorder %s254, %s255
      %p269 = scmp.eq.s32.totalorder %s42, 5
      %p270 = por %p268, %p269
      %p272 = scmp.ne.s32.totalorder %s255, %s271
      %p273 = scmp.eq.s32.totalorder %s42, 0
      %p274 = por %p272, %p273
      %s275 = ssub.s32 %s43, %s62
      %s276 = ssub.s32 %s45, %s54
      %s277 = sor.u32 %s275, %s276
      %p278 = scmp.eq.s32.totalorder %s277, 0
      %s280 = sadd.s32 %s279, 1
      %s281 = scalar_select %p278, %s279, %s280
      %p284 = pneg %p278
      %p285 = scmp.eq.s32.totalorder %s36, 5
      %p286 = por %p284, %p285
      %p287 = scmp.ne.s32.totalorder %s279, %s282
      %p288 = scmp.eq.s32.totalorder %s36, 0
      %p289 = por %p287, %p288
      %p290 = scmp.ne.s32.totalorder %s279, %s282
      %p291 = scmp.eq.s32.totalorder %s41, 5
      %p292 = por %p290, %p291
      %p293 = scmp.ne.s32.totalorder %s282, %s283
      %p294 = scmp.eq.s32.totalorder %s41, 0
      %p295 = por %p293, %p294
      %p296 = scmp.ne.s32.totalorder %s282, %s283
      %p297 = scmp.eq.s32.totalorder %s42, 5
      %p298 = por %p296, %p297
      %p300 = scmp.ne.s32.totalorder %s283, %s299
      %p301 = scmp.eq.s32.totalorder %s42, 0
      %p302 = por %p300, %p301
      %s304 = sadd.s32 %s303, 1
      %p307 = scmp.eq.s32.totalorder %s36, 5
      %p308 = scmp.ne.s32.totalorder %s303, %s305
      %p309 = scmp.eq.s32.totalorder %s36, 0
      %p310 = por %p308, %p309
      %p311 = scmp.ne.s32.totalorder %s303, %s305
      %p312 = scmp.eq.s32.totalorder %s41, 5
      %p313 = por %p311, %p312
      %p314 = scmp.ne.s32.totalorder %s305, %s306
      %p315 = scmp.eq.s32.totalorder %s41, 0
      %p316 = por %p314, %p315
      %p317 = scmp.ne.s32.totalorder %s305, %s306
      %p318 = scmp.eq.s32.totalorder %s42, 5
      %p319 = por %p317, %p318
      %p321 = scmp.ne.s32.totalorder %s306, %s320
      %p322 = scmp.eq.s32.totalorder %s42, 0
      %p323 = por %p321, %p322
      %s325 = sadd.s32 %s324, 1
      %p328 = scmp.eq.s32.totalorder %s36, 5
      %p329 = scmp.ne.s32.totalorder %s324, %s326
      %p330 = scmp.eq.s32.totalorder %s36, 0
      %p331 = por %p329, %p330
      %p332 = scmp.ne.s32.totalorder %s324, %s326
      %p333 = scmp.eq.s32.totalorder %s41, 5
      %p334 = por %p332, %p333
      %p335 = scmp.ne.s32.totalorder %s326, %s327
      %p336 = scmp.eq.s32.totalorder %s41, 0
      %p337 = por %p335, %p336
      %p338 = scmp.ne.s32.totalorder %s326, %s327
      %p339 = scmp.eq.s32.totalorder %s42, 5
      %p340 = por %p338, %p339
      %p342 = scmp.ne.s32.totalorder %s327, %s341
      %p343 = scmp.eq.s32.totalorder %s42, 0
      %p344 = por %p342, %p343
      %s345 = sadd.s32 %s44, %s45
      %s346 = sadd.s32 %s58, %s54
      %s347 = ssub.s32 %s43, %s62
      %s348 = ssub.s32 %s345, %s346
      %s349 = sor.u32 %s347, %s348
      %p350 = scmp.eq.s32.totalorder %s349, 0
      %s352 = sadd.s32 %s351, 1
      %s353 = scalar_select %p350, %s351, %s352
      %p356 = pneg %p350
      %p357 = scmp.eq.s32.totalorder %s36, 5
      %p358 = por %p356, %p357
      %p359 = scmp.ne.s32.totalorder %s351, %s354
      %p360 = scmp.eq.s32.totalorder %s36, 0
      %p361 = por %p359, %p360
      %p362 = scmp.ne.s32.totalorder %s351, %s354
      %p363 = scmp.eq.s32.totalorder %s41, 5
      %p364 = por %p362, %p363
      %p365 = scmp.ne.s32.totalorder %s354, %s355
      %p366 = scmp.eq.s32.totalorder %s41, 0
      %p367 = por %p365, %p366
      %p368 = scmp.ne.s32.totalorder %s354, %s355
      %p369 = scmp.eq.s32.totalorder %s42, 5
      %p370 = por %p368, %p369
      %p372 = scmp.ne.s32.totalorder %s355, %s371
      %p373 = scmp.eq.s32.totalorder %s42, 0
      %p374 = por %p372, %p373
      %s375 = sadd.s32 %s44, %s45
      %s376 = sadd.s32 %s58, %s54
      %s377 = ssub.s32 %s43, %s62
      %s378 = ssub.s32 %s375, %s376
      %s379 = sor.u32 %s377, %s378
      %p380 = scmp.eq.s32.totalorder %s379, 0
      %s382 = sadd.s32 %s381, 1
      %s383 = scalar_select %p380, %s381, %s382
      %p386 = pneg %p380
      %p387 = scmp.eq.s32.totalorder %s36, 5
      %p388 = por %p386, %p387
      %p389 = scmp.ne.s32.totalorder %s381, %s384
      %p390 = scmp.eq.s32.totalorder %s36, 0
      %p391 = por %p389, %p390
      %p392 = scmp.ne.s32.totalorder %s381, %s384
      %p393 = scmp.eq.s32.totalorder %s41, 5
      %p394 = por %p392, %p393
      %p395 = scmp.ne.s32.totalorder %s384, %s385
      %p396 = scmp.eq.s32.totalorder %s41, 0
      %p397 = por %p395, %p396
      %p398 = scmp.ne.s32.totalorder %s384, %s385
      %p399 = scmp.eq.s32.totalorder %s42, 5
      %p400 = por %p398, %p399
      %p402 = scmp.ne.s32.totalorder %s385, %s401
      %p403 = scmp.eq.s32.totalorder %s42, 0
      %p404 = por %p402, %p403
      %p405 = scmp.le.s32.totalorder 1, %s36
      %p406 = scmp.lt.s32.totalorder %s36, 7
      %p407 = pnand %p405, %p406
      %p408 = pneg %p407
      // Predicated region
      $region9: #{tpu_custom_call.1} parent=5 // pred_check
        _
      $region10: #{tpu_custom_call.1} parent=5 // pred_check_branch
        %410 = sbr.rel (%p407) target = $region12
      $region11: #{tpu_custom_call.1} parent=5 // pred_region
        %s411 = ssub.s32 %s36, 1
        // Predicated region
        $region13: #{tpu_custom_call.1} parent=11 // pred_check
          %p412 = pneg %p316
        $region14: #{tpu_custom_call.1} parent=11 // pred_check_branch
          %414 = sbr.rel (%p412) target = $region16
        $region15: #{tpu_custom_call.1} parent=11 // pred_region
          _
        $region16: #{tpu_custom_call.1} parent=11 // pred_fallthru
          _
        // Predicated region
        $region17: #{tpu_custom_call.1} parent=11 // pred_check
          %p415 = pneg %p337
        $region18: #{tpu_custom_call.1} parent=11 // pred_check_branch
          %417 = sbr.rel (%p415) target = $region20
        $region19: #{tpu_custom_call.1} parent=11 // pred_region
          %s419 = ssub.s32 256, 256
          %420 = vsyncadd [#allocation15], %s419
          %s421 = sshll.u32 [#allocation14], 4
          %s422 = int_to_ptr.vmem [resolvable:$true] %s421
          %427 = dma.hbm_to_vmem [thread:$0]  %s8, 256, %s422, [#allocation15], 128, 128, 8
        $region20: #{tpu_custom_call.1} parent=11 // pred_fallthru
          _
      $region12: #{tpu_custom_call.1} parent=5 // pred_fallthru
        _
      %p428 = scmp.lt.s32.totalorder %s36, 6
      // Predicated region
      $region21: #{tpu_custom_call.1} parent=5 // pred_check
        %p429 = pneg %p428
      $region22: #{tpu_custom_call.1} parent=5 // pred_check_branch
        %431 = sbr.rel (%p429) target = $region24
      $region23: #{tpu_custom_call.1} parent=5 // pred_region
        // Predicated region
        $region25: #{tpu_custom_call.1} parent=23 // pred_check
          %p432 = pneg %p79
        $region26: #{tpu_custom_call.1} parent=23 // pred_check_branch
          %434 = sbr.rel (%p432) target = $region28
        $region27: #{tpu_custom_call.1} parent=23 // pred_region
          %s435 = sand.u32 %s69, 1
          %s436 = scalar_lea.sflag [#allocation3], %s435
          %s437 = sand.u32 %s69, 1
          %s438 = smul.addr %s437, 16
          %s439 = scalar_lea.vmem [#allocation2], %s438
          %s440 = smul.u32 2, %s45
          %s442 = ssub.s32 256, 256
          %443 = vsyncadd %s436, %s442
          %s444 = smul.addr %s44, 2
          %s445 = sadd.s32 %s440, %s444
          %s446 = smul.addr %s43, 6
          %s447 = sadd.s32 %s445, %s446
          %s448 = smul.addr %s447, 128
          %s449 = scalar_lea.hbm %s0, %s448
          %s450 = sshll.u32 %s439, 4
          %s451 = int_to_ptr.vmem [resolvable:$true] %s450
          %456 = dma.hbm_to_vmem [thread:$0]  %s449, 256, %s451, %s436, 128, 128, 8
        $region28: #{tpu_custom_call.1} parent=23 // pred_fallthru
          _
        // Predicated region
        $region29: #{tpu_custom_call.1} parent=23 // pred_check
          %p457 = pneg %p117
        $region30: #{tpu_custom_call.1} parent=23 // pred_check_branch
          %459 = sbr.rel (%p457) target = $region32
        $region31: #{tpu_custom_call.1} parent=23 // pred_region
          %s460 = sand.u32 %s36, 1
          %s461 = scalar_lea.sflag [#allocation6], %s460
          %s462 = sand.u32 %s107, 1
          %s463 = smul.addr %s462, 8
          %s464 = scalar_lea.vmem [#allocation5], %s463
          %s465 = smul.u32 %s45, 2
          %s466 = ssub.s32 %s465, 1
          %p467 = scmp.gt.s32.totalorder %s466, 0
          %s468 = scalar_select %p467, %s466, 0
          %s470 = ssub.s32 128, 128
          %471 = vsyncadd %s461, %s470
          %s472 = smul.addr %s44, 2
          %s473 = sadd.s32 %s468, %s472
          %s474 = smul.addr %s43, 6
          %s475 = sadd.s32 %s473, %s474
          %s476 = smul.addr %s475, 128
          %s477 = scalar_lea.hbm %s1, %s476
          %s479 = sshll.u32 %s464, 4
          %s480 = int_to_ptr.vmem [resolvable:$true] %s479
          %482 = dma.hbm_to_vmem [thread:$0]  %s477, 128, %s480, %s461
        $region32: #{tpu_custom_call.1} parent=23 // pred_fallthru
          _
        // Predicated region
        $region33: #{tpu_custom_call.1} parent=23 // pred_check
          %p483 = pneg %p155
        $region34: #{tpu_custom_call.1} parent=23 // pred_check_branch
          %485 = sbr.rel (%p483) target = $region36
        $region35: #{tpu_custom_call.1} parent=23 // pred_region
          %s486 = sand.u32 %s36, 1
          %s487 = scalar_lea.sflag [#allocation6], %s486
          %s488 = sand.u32 %s145, 1
          %s489 = smul.addr %s488, 8
          %s490 = scalar_lea.vmem [#allocation7], %s489
          %s491 = sadd.s32 %s45, 1
          %s492 = smul.u32 %s491, 2
          %p493 = scmp.lt.s32.totalorder %s492, 1
          %s494 = scalar_select %p493, %s492, 1
          %s496 = ssub.s32 128, 128
          %497 = vsyncadd %s487, %s496
          %s498 = smul.addr %s44, 2
          %s499 = sadd.s32 %s494, %s498
          %s500 = smul.addr %s43, 6
          %s501 = sadd.s32 %s499, %s500
          %s502 = smul.addr %s501, 128
          %s503 = scalar_lea.hbm %s2, %s502
          %s505 = sshll.u32 %s490, 4
          %s506 = int_to_ptr.vmem [resolvable:$true] %s505
          %508 = dma.hbm_to_vmem [thread:$0]  %s503, 128, %s506, %s487
        $region36: #{tpu_custom_call.1} parent=23 // pred_fallthru
          _
        // Predicated region
        $region37: #{tpu_custom_call.1} parent=23 // pred_check
          %p509 = pneg %p185
        $region38: #{tpu_custom_call.1} parent=23 // pred_check_branch
          %511 = sbr.rel (%p509) target = $region40
        $region39: #{tpu_custom_call.1} parent=23 // pred_region
          %s512 = sand.u32 %s36, 1
          %s513 = scalar_lea.sflag [#allocation9], %s512
          %s514 = sand.u32 %s175, 1
          %s515 = smul.addr %s514, 16
          %s516 = scalar_lea.vmem [#allocation8], %s515
          %s517 = smul.u32 2, %s45
          %s519 = ssub.s32 256, 256
          %520 = vsyncadd %s513, %s519
          %s521 = smul.addr %s44, 2
          %s522 = sadd.s32 %s517, %s521
          %s523 = smul.addr %s43, 6
          %s524 = sadd.s32 %s522, %s523
          %s525 = smul.addr %s524, 128
          %s526 = scalar_lea.hbm %s3, %s525
          %s527 = sshll.u32 %s516, 4
          %s528 = int_to_ptr.vmem [resolvable:$true] %s527
          %533 = dma.hbm_to_vmem [thread:$0]  %s526, 256, %s528, %s513, 128, 128, 8
        $region40: #{tpu_custom_call.1} parent=23 // pred_fallthru
          _
        // Predicated region
        $region41: #{tpu_custom_call.1} parent=23 // pred_check
          %p534 = pneg %p223
        $region42: #{tpu_custom_call.1} parent=23 // pred_check_branch
          %536 = sbr.rel (%p534) target = $region44
        $region43: #{tpu_custom_call.1} parent=23 // pred_region
          %s537 = sand.u32 %s36, 1
          %s538 = scalar_lea.sflag [#allocation9], %s537
          %s539 = sand.u32 %s213, 1
          %s540 = smul.addr %s539, 8
          %s541 = scalar_lea.vmem [#allocation10], %s540
          %s542 = smul.u32 %s45, 2
          %s543 = ssub.s32 %s542, 1
          %p544 = scmp.gt.s32.totalorder %s543, 0
          %s545 = scalar_select %p544, %s543, 0
          %s547 = ssub.s32 128, 128
          %548 = vsyncadd %s538, %s547
          %s549 = smul.addr %s44, 2
          %s550 = sadd.s32 %s545, %s549
          %s551 = smul.addr %s43, 6
          %s552 = sadd.s32 %s550, %s551
          %s553 = smul.addr %s552, 128
          %s554 = scalar_lea.hbm %s4, %s553
          %s556 = sshll.u32 %s541, 4
          %s557 = int_to_ptr.vmem [resolvable:$true] %s556
          %559 = dma.hbm_to_vmem [thread:$0]  %s554, 128, %s557, %s538
        $region44: #{tpu_custom_call.1} parent=23 // pred_fallthru
          _
        // Predicated region
        $region45: #{tpu_custom_call.1} parent=23 // pred_check
          %p560 = pneg %p261
        $region46: #{tpu_custom_call.1} parent=23 // pred_check_branch
          %562 = sbr.rel (%p560) target = $region48
        $region47: #{tpu_custom_call.1} parent=23 // pred_region
          %s563 = sand.u32 %s36, 1
          %s564 = scalar_lea.sflag [#allocation12], %s563
          %s565 = sand.u32 %s251, 1
          %s566 = smul.addr %s565, 8
          %s567 = scalar_lea.vmem [#allocation11], %s566
          %s568 = sadd.s32 %s45, 1
          %s569 = smul.u32 %s568, 2
          %p570 = scmp.lt.s32.totalorder %s569, 1
          %s571 = scalar_select %p570, %s569, 1
          %s573 = ssub.s32 128, 128
          %574 = vsyncadd %s564, %s573
          %s575 = smul.addr %s44, 2
          %s576 = sadd.s32 %s571, %s575
          %s577 = smul.addr %s43, 6
          %s578 = sadd.s32 %s576, %s577
          %s579 = smul.addr %s578, 128
          %s580 = scalar_lea.hbm %s5, %s579
          %s582 = sshll.u32 %s567, 4
          %s583 = int_to_ptr.vmem [resolvable:$true] %s582
          %585 = dma.hbm_to_vmem [thread:$0]  %s580, 128, %s583, %s564
        $region48: #{tpu_custom_call.1} parent=23 // pred_fallthru
          _
        // Predicated region
        $region49: #{tpu_custom_call.1} parent=23 // pred_check
          %p586 = pneg %p289
        $region50: #{tpu_custom_call.1} parent=23 // pred_check_branch
          %588 = sbr.rel (%p586) target = $region52
        $region51: #{tpu_custom_call.1} parent=23 // pred_region
          %s589 = sand.u32 %s36, 1
          %s590 = scalar_lea.sflag [#allocation12], %s589
          %s591 = sand.u32 %s279, 1
          %s592 = smul.addr %s591, 16
          %s593 = scalar_lea.vmem [#allocation13], %s592
          %s594 = smul.u32 2, %s45
          %s596 = ssub.s32 256, 256
          %597 = vsyncadd %s590, %s596
          %s598 = smul.addr %s43, 2
          %s599 = sadd.s32 %s594, %s598
          %s600 = smul.addr %s599, 128
          %s601 = scalar_lea.hbm %s6, %s600
          %s602 = sshll.u32 %s593, 4
          %s603 = int_to_ptr.vmem [resolvable:$true] %s602
          %608 = dma.hbm_to_vmem [thread:$0]  %s601, 256, %s603, %s590, 128, 128, 8
        $region52: #{tpu_custom_call.1} parent=23 // pred_fallthru
          _
      $region24: #{tpu_custom_call.1} parent=5 // pred_fallthru
        _
      %p609 = scmp.le.s32.totalorder 1, %s36
      %p610 = scmp.lt.s32.totalorder %s36, 7
      %p611 = pnand %p609, %p610
      %p612 = pneg %p611
      // Predicated region
      $region53: #{tpu_custom_call.1} parent=5 // pred_check
        _
      $region54: #{tpu_custom_call.1} parent=5 // pred_check_branch
        %614 = sbr.rel (%p611) target = $region56
      $region55: #{tpu_custom_call.1} parent=5 // pred_region
        %s615 = ssub.s32 %s36, 1
        %s616 = sand.u32 %s72, 1
        %s617 = scalar_lea.sflag [#allocation3], %s616
        %s618 = sand.u32 %s72, 1
        %s619 = smul.addr %s618, 16
        %s620 = scalar_lea.vmem [#allocation2], %s619
        // Predicated region
        $region57: #{tpu_custom_call.1} parent=55 // pred_check
          %p621 = pneg %p85
        $region58: #{tpu_custom_call.1} parent=55 // pred_check_branch
          %623 = sbr.rel (%p621) target = $region60
        $region59: #{tpu_custom_call.1} parent=55 // pred_region
          %624 = dma.done %s617, 256
        $region60: #{tpu_custom_call.1} parent=55 // pred_fallthru
          _
        %s625 = sand.u32 %s41, 1
        %s626 = scalar_lea.sflag [#allocation6], %s625
        %s627 = sand.u32 %s110, 1
        %s628 = smul.addr %s627, 8
        %s629 = scalar_lea.vmem [#allocation5], %s628
        // Predicated region
        $region61: #{tpu_custom_call.1} parent=55 // pred_check
          %p630 = pneg %p123
        $region62: #{tpu_custom_call.1} parent=55 // pred_check_branch
          %632 = sbr.rel (%p630) target = $region64
        $region63: #{tpu_custom_call.1} parent=55 // pred_region
          %633 = dma.done %s626, 128
        $region64: #{tpu_custom_call.1} parent=55 // pred_fallthru
          _
        %s634 = sand.u32 %s41, 1
        %s635 = scalar_lea.sflag [#allocation6], %s634
        %s636 = sand.u32 %s148, 1
        %s637 = smul.addr %s636, 8
        %s638 = scalar_lea.vmem [#allocation7], %s637
        // Predicated region
        $region65: #{tpu_custom_call.1} parent=55 // pred_check
          %p639 = pneg %p161
        $region66: #{tpu_custom_call.1} parent=55 // pred_check_branch
          %641 = sbr.rel (%p639) target = $region68
        $region67: #{tpu_custom_call.1} parent=55 // pred_region
          %642 = dma.done %s635, 128
        $region68: #{tpu_custom_call.1} parent=55 // pred_fallthru
          _
        %s643 = sand.u32 %s41, 1
        %s644 = scalar_lea.sflag [#allocation9], %s643
        %s645 = sand.u32 %s178, 1
        %s646 = smul.addr %s645, 16
        %s647 = scalar_lea.vmem [#allocation8], %s646
        // Predicated region
        $region69: #{tpu_custom_call.1} parent=55 // pred_check
          %p648 = pneg %p191
        $region70: #{tpu_custom_call.1} parent=55 // pred_check_branch
          %650 = sbr.rel (%p648) target = $region72
        $region71: #{tpu_custom_call.1} parent=55 // pred_region
          %651 = dma.done %s644, 256
        $region72: #{tpu_custom_call.1} parent=55 // pred_fallthru
          _
        %s652 = sand.u32 %s41, 1
        %s653 = scalar_lea.sflag [#allocation9], %s652
        %s654 = sand.u32 %s216, 1
        %s655 = smul.addr %s654, 8
        %s656 = scalar_lea.vmem [#allocation10], %s655
        // Predicated region
        $region73: #{tpu_custom_call.1} parent=55 // pred_check
          %p657 = pneg %p229
        $region74: #{tpu_custom_call.1} parent=55 // pred_check_branch
          %659 = sbr.rel (%p657) target = $region76
        $region75: #{tpu_custom_call.1} parent=55 // pred_region
          %660 = dma.done %s653, 128
        $region76: #{tpu_custom_call.1} parent=55 // pred_fallthru
          _
        %s661 = sand.u32 %s41, 1
        %s662 = scalar_lea.sflag [#allocation12], %s661
        %s663 = sand.u32 %s254, 1
        %s664 = smul.addr %s663, 8
        %s665 = scalar_lea.vmem [#allocation11], %s664
        // Predicated region
        $region77: #{tpu_custom_call.1} parent=55 // pred_check
          %p666 = pneg %p267
        $region78: #{tpu_custom_call.1} parent=55 // pred_check_branch
          %668 = sbr.rel (%p666) target = $region80
        $region79: #{tpu_custom_call.1} parent=55 // pred_region
          %669 = dma.done %s662, 128
        $region80: #{tpu_custom_call.1} parent=55 // pred_fallthru
          _
        %s670 = sand.u32 %s41, 1
        %s671 = scalar_lea.sflag [#allocation12], %s670
        %s672 = sand.u32 %s282, 1
        %s673 = smul.addr %s672, 16
        %s674 = scalar_lea.vmem [#allocation13], %s673
        // Predicated region
        $region81: #{tpu_custom_call.1} parent=55 // pred_check
          %p675 = pneg %p295
        $region82: #{tpu_custom_call.1} parent=55 // pred_check_branch
          %677 = sbr.rel (%p675) target = $region84
        $region83: #{tpu_custom_call.1} parent=55 // pred_region
          %678 = dma.done %s671, 256
        $region84: #{tpu_custom_call.1} parent=55 // pred_fallthru
          _
        // Predicated region
        $region85: #{tpu_custom_call.1} parent=55 // pred_check
          %p679 = pneg %p337
        $region86: #{tpu_custom_call.1} parent=55 // pred_check_branch
          %681 = sbr.rel (%p679) target = $region88
        $region87: #{tpu_custom_call.1} parent=55 // pred_region
          %682 = dma.done [#allocation15], 256
        $region88: #{tpu_custom_call.1} parent=55 // pred_fallthru
          _
        %s683 = sand.u32 %s72, 1
        %s684 = scalar_lea.sflag [#allocation3], %s683
        %s685 = sand.u32 %s72, 1
        %s686 = smul.addr %s685, 16
        %s687 = scalar_lea.vmem [#allocation2], %s686
        %p688 = pneg %p85
        %p689 = pneg %p82
        %s690 = sand.u32 %s41, 1
        %s691 = scalar_lea.sflag [#allocation6], %s690
        %s692 = sand.u32 %s110, 1
        %s693 = smul.addr %s692, 8
        %s694 = scalar_lea.vmem [#allocation5], %s693
        %p695 = pneg %p123
        %p696 = pneg %p120
        %s697 = sand.u32 %s41, 1
        %s698 = scalar_lea.sflag [#allocation6], %s697
        %s699 = sand.u32 %s148, 1
        %s700 = smul.addr %s699, 8
        %s701 = scalar_lea.vmem [#allocation7], %s700
        %p702 = pneg %p161
        %p703 = pneg %p158
        %s704 = sand.u32 %s41, 1
        %s705 = scalar_lea.sflag [#allocation9], %s704
        %s706 = sand.u32 %s178, 1
        %s707 = smul.addr %s706, 16
        %s708 = scalar_lea.vmem [#allocation8], %s707
        %p709 = pneg %p191
        %p710 = pneg %p188
        %s711 = sand.u32 %s41, 1
        %s712 = scalar_lea.sflag [#allocation9], %s711
        %s713 = sand.u32 %s216, 1
        %s714 = smul.addr %s713, 8
        %s715 = scalar_lea.vmem [#allocation10], %s714
        %p716 = pneg %p229
        %p717 = pneg %p226
        %s718 = sand.u32 %s41, 1
        %s719 = scalar_lea.sflag [#allocation12], %s718
        %s720 = sand.u32 %s254, 1
        %s721 = smul.addr %s720, 8
        %s722 = scalar_lea.vmem [#allocation11], %s721
        %p723 = pneg %p267
        %p724 = pneg %p264
        %s725 = sand.u32 %s41, 1
        %s726 = scalar_lea.sflag [#allocation12], %s725
        %s727 = sand.u32 %s282, 1
        %s728 = smul.addr %s727, 16
        %s729 = scalar_lea.vmem [#allocation13], %s728
        %p730 = pneg %p295
        %p731 = pneg %p292
        %p732 = pneg %p316
        %p733 = pneg %p313
        %p734 = pneg %p337
        %p735 = pneg %p334
        %p736 = pneg %p367
        %p737 = pneg %p364
        %s738 = sand.u32 %s354, 1
        %s739 = scalar_lea.sflag [#allocation4], %s738
        %s740 = sand.u32 %s354, 1
        %s741 = scalar_lea.vmem [#allocation16], %s740
        %p742 = pneg %p397
        %p743 = pneg %p394
        %s744 = sand.u32 %s384, 1
        %s745 = scalar_lea.sflag [#allocation18], %s744
        %s746 = sand.u32 %s384, 1
        %s747 = scalar_lea.vmem [#allocation17], %s746
        %s748 = smul.u32 2, %s48
        %s749 = smul.u32 %s48, 2
        %s750 = ssub.s32 %s749, 1
        %p751 = scmp.gt.s32.totalorder %s750, 0
        %s752 = scalar_select %p751, %s750, 0
        %s753 = sadd.s32 %s48, 1
        %s754 = smul.u32 %s753, 2
        %p755 = scmp.lt.s32.totalorder %s754, 1
        %s756 = scalar_select %p755, %s754, 1
        %s757 = smul.u32 2, %s48
        %s758 = smul.u32 %s48, 2
        %s759 = ssub.s32 %s758, 1
        %p760 = scmp.gt.s32.totalorder %s759, 0
        %s761 = scalar_select %p760, %s759, 0
        %s762 = sadd.s32 %s48, 1
        %s763 = smul.u32 %s762, 2
        %p764 = scmp.lt.s32.totalorder %s763, 1
        %s765 = scalar_select %p764, %s763, 1
        %s766 = smul.u32 2, %s48
        %s767 = sadd.s32 %s47, %s48
        %s768 = sadd.s32 %s47, %s48
        %p769 = scmp.gt.s32.totalorder %s48, 0
        %s770 = scalar_select %p769, 1, 0
        %s771 = scvt.s32.f32 %s770
        %p772 = scmp.lt.s32.totalorder %s48, 0
        %s773 = scalar_select %p772, 1, 0
        %s774 = scvt.s32.f32 %s773
        %v775 = vld [vmem:[%s620] sm:$0xff]
        %v776 = vld [vmem:[%s620 + $0x8] sm:$0xff]
        %v777 = vld [vmem:[%s647] sm:$0xff]
        %v778 = vld [vmem:[%s647 + $0x8] sm:$0xff]
        %v779 = vld [vmem:[%s674] sm:$0xff]
        %v780 = vld [vmem:[%s674 + $0x8] sm:$0xff]
        %v781 = vsub.f32 %v775, %v777
        %v782 = vsub.f32 %v776, %v778
        %v783 = vmul.f32 %v781, %v781
        %v784 = vmul.f32 %v782, %v782
        %v785 = vmul.f32 %v783, %v779
        %v786 = vmul.f32 %v784, %v780
        %vm787 = vcmask 130048
        %v788 = vsel %vm787, %v785, 0.0
        %v789 = vsel %vm787, %v786, 0.0
        %v790 = vadd.f32 %v788, %v789
        %791 = vadd.xlane.f32.xlu0 %v790
        %v792 = vpop.xlane.xlu0 %791
        %v793 = vrot.slane %v792, 4
        %v794 = vadd.f32 %v792, %v793
        %v795 = vrot.slane %v794, 2
        %v796 = vadd.f32 %v794, %v795
        %v797 = vrot.slane %v796, 1
        %v798 = vadd.f32 %v796, %v797
        %s799 = vtos %v798
        %v800 = vld [vmem:[%s629] sm:$0xff]
        %v801 = vstv %s771
        %v802 = vmul.f32 %v800, %v801
        %v803 = vld [vmem:[%s638] sm:$0xff]
        %v804 = vstv %s774
        %v805 = vmul.f32 %v803, %v804
        %v806 = vld [vmem:[%s656] sm:$0xff]
        %v807 = vmul.f32 %v806, %v801
        %v808 = vld [vmem:[%s665] sm:$0xff]
        %v809 = vmul.f32 %v808, %v804
        %v810 = vld [vmem:[%s7] sm:$0xff]
        %v811 = vld [vmem:[%s7 + $0x8] sm:$0xff]
        %v812 = vld [vmem:[#allocation14] sm:$0xff]
        %v813 = vld [vmem:[#allocation14 + $0x8] sm:$0xff]
        %v814 = vmul.f32 %v802, %v802
        %v815 = vmul.f32 %v775, %v775
        %v816 = vmul.f32 %v776, %v776
        %v817 = vmul.f32 %v805, %v805
        %v818 = vmul.f32 %v807, %v807
        %v819 = vmul.f32 %v777, %v777
        %v820 = vmul.f32 %v778, %v778
        %v821 = vmul.f32 %v809, %v809
        %v822 = vadd.f32 %v814, %v818
        %v823 = vadd.f32 %v815, %v819
        %v824 = vadd.f32 %v816, %v820
        %v825 = vadd.f32 %v817, %v821
        %v826 = vmul.f32 %v802, %v807
        %v827 = vmul.f32 %v775, %v777
        %v828 = vmul.f32 %v776, %v778
        %v829 = vmul.f32 %v805, %v809
        %v831 = vsel %vm787, %v802, 0
        %v834 = vsel %vm787, %v775, 0
        %v837 = vsel %vm787, %v776, 0
        %v840 = vsel %vm787, %v805, 0
        %v843 = vsel %vm787, %v807, 0
        %v846 = vsel %vm787, %v777, 0
        %v849 = vsel %vm787, %v778, 0
        %v852 = vsel %vm787, %v809, 0
        %v855 = vsel %vm787, %v822, 0
        %v858 = vsel %vm787, %v823, 0
        %v861 = vsel %vm787, %v824, 0
        %v864 = vsel %vm787, %v825, 0
        %v867 = vsel %vm787, %v826, 0
        %v870 = vsel %vm787, %v827, 0
        %v873 = vsel %vm787, %v828, 0
        %v876 = vsel %vm787, %v829, 0
        %878 = vmatprep.subr.mxu0 0.0
        %879 = vmatpush1.msra.mxu0 %v812
        %880 = vmatprep.subr.mxu0 0.0
        %881 = vmatpush1.msra.mxu0 %v813
        %882 = vmatprep.subr.mxu0 0.0
        %883 = vmatpush1.msra.mxu0 0.0
        %884 = vmatprep.subr.mxu0 0.0
        %885 = vmatpush1.msra.mxu0 0.0
        %886 = vmatprep.subr.mxu0 0.0
        %887 = vmatpush1.msra.mxu0 0.0
        %888 = vmatprep.subr.mxu0 0.0
        %889 = vmatpush1.msra.mxu0 0.0
        %890 = vmatprep.subr.mxu0 0.0
        %891 = vmatpush1.msra.mxu0 0.0
        %892 = vmatprep.subr.mxu0 0.0
        %893 = vmatpush1.msra.mxu0 0.0
        %894 = vmatprep.subr.mxu0 0.0
        %895 = vmatpush1.msra.mxu0 0.0
        %896 = vmatprep.subr.mxu0 0.0
        %897 = vmatpush1.msra.mxu0 0.0
        %898 = vmatprep.subr.mxu0 0.0
        %899 = vmatpush1.msra.mxu0 0.0
        %900 = vmatprep.subr.mxu0 0.0
        %901 = vmatpush1.msra.mxu0 0.0
        %902 = vmatprep.subr.mxu0 0.0
        %903 = vmatpush1.msra.mxu0 0.0
        %904 = vmatprep.subr.mxu0 0.0
        %905 = vmatpush1.msra.mxu0 0.0
        %906 = vmatprep.subr.mxu0 0.0
        %907 = vmatpush1.msra.mxu0 0.0
        %908 = vmatprep.subr.mxu0 0.0
        %909 = vmatpush1.msra.mxu0 0.0
        %910 = vmatprep.subr.mxu0 0.0
        %911 = vmatpush1.msra.mxu0 0.0
        %912 = vmatprep.subr.mxu0 0.0
        %913 = vmatpush1.msra.mxu0 0.0
        %914 = vmatprep.subr.mxu0 0.0
        %915 = vmatpush1.msra.mxu0 0.0
        %916 = vmatprep.subr.mxu0 0.0
        %917 = vmatpush1.msra.mxu0 0.0
        %918 = vmatprep.subr.mxu0 0.0
        %919 = vmatpush1.msra.mxu0 0.0
        %920 = vmatprep.subr.mxu0 0.0
        %921 = vmatpush1.msra.mxu0 0.0
        %922 = vmatprep.subr.mxu0 0.0
        %923 = vmatpush1.msra.mxu0 0.0
        %924 = vmatprep.subr.mxu0 0.0
        %925 = vmatpush1.msra.mxu0 0.0
        %926 = vmatprep.subr.mxu0 0.0
        %927 = vmatpush1.msra.mxu0 0.0
        %928 = vmatprep.subr.mxu0 0.0
        %929 = vmatpush1.msra.mxu0 0.0
        %930 = vmatprep.subr.mxu0 0.0
        %931 = vmatpush1.msra.mxu0 0.0
        %932 = vmatprep.subr.mxu0 0.0
        %933 = vmatpush1.msra.mxu0 0.0
        %934 = vmatprep.subr.mxu0 0.0
        %935 = vmatpush1.msra.mxu0 0.0
        %936 = vmatprep.subr.mxu0 0.0
        %937 = vmatpush1.msra.mxu0 0.0
        %938 = vmatprep.subr.mxu0 0.0
        %939 = vmatpush1.msra.mxu0 0.0
        %940 = vmatprep.subr.mxu0 0.0
        %941 = vmatpush1.msra.mxu0 0.0
        %942 = vmatprep.mubr.f32.mxu0 0.0
        %943 = vmatmul.mubr.f32.gmra.mrb[0].mxu0 %v831
        %v944 = vpop.f32.mrb[0].mxu0
        %v945 = vadd.f32 0.0, %v944
        %v946 = vpop.f32.mrb[0].mxu0
        %947 = vmatprep.mubr.f32.mxu0 0.0
        %948 = vmatmul.mubr.f32.gmra.mrb[0].mxu0 %v834
        %v949 = vpop.f32.mrb[0].mxu0
        %v950 = vadd.f32 0.0, %v949
        %v951 = vpop.f32.mrb[0].mxu0
        %952 = vmatprep.mubr.f32.mxu0 0.0
        %953 = vmatmul.mubr.f32.gmra.mrb[0].mxu0 %v837
        %v954 = vpop.f32.mrb[0].mxu0
        %v955 = vadd.f32 0.0, %v954
        %v956 = vpop.f32.mrb[0].mxu0
        %957 = vmatprep.mubr.f32.mxu0 0.0
        %958 = vmatmul.mubr.f32.gmra.mrb[0].mxu0 %v840
        %v959 = vpop.f32.mrb[0].mxu0
        %v960 = vadd.f32 0.0, %v959
        %v961 = vpop.f32.mrb[0].mxu0
        %962 = vmatprep.mubr.f32.mxu0 0.0
        %963 = vmatmul.mubr.f32.gmra.mrb[0].mxu0 %v843
        %v964 = vpop.f32.mrb[0].mxu0
        %v965 = vadd.f32 0.0, %v964
        %v966 = vpop.f32.mrb[0].mxu0
        %967 = vmatprep.mubr.f32.mxu0 0.0
        %968 = vmatmul.mubr.f32.gmra.mrb[0].mxu0 %v846
        %v969 = vpop.f32.mrb[0].mxu0
        %v970 = vadd.f32 0.0, %v969
        %v971 = vpop.f32.mrb[0].mxu0
        %972 = vmatprep.mubr.f32.mxu0 0.0
        %973 = vmatmul.mubr.f32.gmra.mrb[0].mxu0 %v849
        %v974 = vpop.f32.mrb[0].mxu0
        %v975 = vadd.f32 0.0, %v974
        %v976 = vpop.f32.mrb[0].mxu0
        %977 = vmatprep.mubr.f32.mxu0 0.0
        %978 = vmatmul.mubr.f32.gmra.mrb[0].mxu0 %v852
        %v979 = vpop.f32.mrb[0].mxu0
        %v980 = vadd.f32 0.0, %v979
        %v981 = vpop.f32.mrb[0].mxu0
        %982 = vmatprep.mubr.f32.mxu0 0.0
        %983 = vmatmul.mubr.f32.gmra.mrb[0].mxu0 %v855
        %v984 = vpop.f32.mrb[0].mxu0
        %v985 = vadd.f32 0.0, %v984
        %v986 = vpop.f32.mrb[0].mxu0
        %987 = vmatprep.mubr.f32.mxu0 0.0
        %988 = vmatmul.mubr.f32.gmra.mrb[0].mxu0 %v858
        %v989 = vpop.f32.mrb[0].mxu0
        %v990 = vadd.f32 0.0, %v989
        %v991 = vpop.f32.mrb[0].mxu0
        %992 = vmatprep.mubr.f32.mxu0 0.0
        %993 = vmatmul.mubr.f32.gmra.mrb[0].mxu0 %v861
        %v994 = vpop.f32.mrb[0].mxu0
        %v995 = vadd.f32 0.0, %v994
        %v996 = vpop.f32.mrb[0].mxu0
        %997 = vmatprep.mubr.f32.mxu0 0.0
        %998 = vmatmul.mubr.f32.gmra.mrb[0].mxu0 %v864
        %v999 = vpop.f32.mrb[0].mxu0
        %v1000 = vadd.f32 0.0, %v999
        %v1001 = vpop.f32.mrb[0].mxu0
        %1002 = vmatprep.mubr.f32.mxu0 0.0
        %1003 = vmatmul.mubr.f32.gmra.mrb[0].mxu0 %v867
        %v1004 = vpop.f32.mrb[0].mxu0
        %v1005 = vadd.f32 0.0, %v1004
        %v1006 = vpop.f32.mrb[0].mxu0
        %1007 = vmatprep.mubr.f32.mxu0 0.0
        %1008 = vmatmul.mubr.f32.gmra.mrb[0].mxu0 %v870
        %v1009 = vpop.f32.mrb[0].mxu0
        %v1010 = vadd.f32 0.0, %v1009
        %v1011 = vpop.f32.mrb[0].mxu0
        %1012 = vmatprep.mubr.f32.mxu0 0.0
        %1013 = vmatmul.mubr.f32.gmra.mrb[0].mxu0 %v873
        %v1014 = vpop.f32.mrb[0].mxu0
        %v1015 = vadd.f32 0.0, %v1014
        %v1016 = vpop.f32.mrb[0].mxu0
        %1017 = vmatprep.mubr.f32.mxu0 0.0
        %1018 = vmatmul.mubr.f32.gmra.mrb[0].mxu0 %v876
        %v1019 = vpop.f32.mrb[0].mxu0
        %v1020 = vadd.f32 0.0, %v1019
        %v1021 = vpop.f32.mrb[0].mxu0
        %1022 = vdwg.mxu0
        %vm1023 = vcmask 261120
        %v1025 = vsel %vm1023, %v810, 0
        %v1028 = vsel %vm1023, %v811, 0
        %1030 = vmatprep.subr.mxu0 0.0
        %1031 = vmatpush1.msra.mxu0 %v945
        %1032 = vmatprep.subr.mxu0 0.0
        %1033 = vmatpush1.msra.mxu0 %v950
        %1034 = vmatprep.subr.mxu0 0.0
        %1035 = vmatpush1.msra.mxu0 %v955
        %1036 = vmatprep.subr.mxu0 0.0
        %1037 = vmatpush1.msra.mxu0 %v960
        %1038 = vmatprep.subr.mxu0 0.0
        %1039 = vmatpush1.msra.mxu0 0.0
        %1040 = vmatprep.subr.mxu0 0.0
        %1041 = vmatpush1.msra.mxu0 0.0
        %1042 = vmatprep.subr.mxu0 0.0
        %1043 = vmatpush1.msra.mxu0 0.0
        %1044 = vmatprep.subr.mxu0 0.0
        %1045 = vmatpush1.msra.mxu0 0.0
        %1046 = vmatprep.subr.mxu0 0.0
        %1047 = vmatpush1.msra.mxu0 0.0
        %1048 = vmatprep.subr.mxu0 0.0
        %1049 = vmatpush1.msra.mxu0 0.0
        %1050 = vmatprep.subr.mxu0 0.0
        %1051 = vmatpush1.msra.mxu0 0.0
        %1052 = vmatprep.subr.mxu0 0.0
        %1053 = vmatpush1.msra.mxu0 0.0
        %1054 = vmatprep.subr.mxu0 0.0
        %1055 = vmatpush1.msra.mxu0 0.0
        %1056 = vmatprep.subr.mxu0 0.0
        %1057 = vmatpush1.msra.mxu0 0.0
        %1058 = vmatprep.subr.mxu0 0.0
        %1059 = vmatpush1.msra.mxu0 0.0
        %1060 = vmatprep.subr.mxu0 0.0
        %1061 = vmatpush1.msra.mxu0 0.0
        %1062 = vmatprep.subr.mxu0 0.0
        %1063 = vmatpush1.msra.mxu0 0.0
        %1064 = vmatprep.subr.mxu0 0.0
        %1065 = vmatpush1.msra.mxu0 0.0
        %1066 = vmatprep.subr.mxu0 0.0
        %1067 = vmatpush1.msra.mxu0 0.0
        %1068 = vmatprep.subr.mxu0 0.0
        %1069 = vmatpush1.msra.mxu0 0.0
        %1070 = vmatprep.subr.mxu0 0.0
        %1071 = vmatpush1.msra.mxu0 0.0
        %1072 = vmatprep.subr.mxu0 0.0
        %1073 = vmatpush1.msra.mxu0 0.0
        %1074 = vmatprep.subr.mxu0 0.0
        %1075 = vmatpush1.msra.mxu0 0.0
        %1076 = vmatprep.subr.mxu0 0.0
        %1077 = vmatpush1.msra.mxu0 0.0
        %1078 = vmatprep.subr.mxu0 0.0
        %1079 = vmatpush1.msra.mxu0 0.0
        %1080 = vmatprep.subr.mxu0 0.0
        %1081 = vmatpush1.msra.mxu0 0.0
        %1082 = vmatprep.subr.mxu0 0.0
        %1083 = vmatpush1.msra.mxu0 0.0
        %1084 = vmatprep.subr.mxu0 0.0
        %1085 = vmatpush1.msra.mxu0 0.0
        %1086 = vmatprep.subr.mxu0 0.0
        %1087 = vmatpush1.msra.mxu0 0.0
        %1088 = vmatprep.subr.mxu0 0.0
        %1089 = vmatpush1.msra.mxu0 0.0
        %1090 = vmatprep.subr.mxu0 0.0
        %1091 = vmatpush1.msra.mxu0 0.0
        %1092 = vmatprep.subr.mxu0 0.0
        %1093 = vmatpush1.msra.mxu0 0.0
        %1094 = vmatprep.mubr.f32.mxu0 0.0
        %1095 = vmatmul.mubr.f32.gmra.mrb[0].mxu0 %v1025
        %v1096 = vpop.f32.mrb[0].mxu0
        %v1097 = vadd.f32 0.0, %v1096
        %v1098 = vpop.f32.mrb[0].mxu0
        %1099 = vmatprep.mubr.f32.mxu0 0.0
        %1100 = vmatmul.mubr.f32.gmra.mrb[0].mxu0 %v1028
        %v1101 = vpop.f32.mrb[0].mxu0
        %v1102 = vadd.f32 0.0, %v1101
        %v1103 = vpop.f32.mrb[0].mxu0
        %1104 = vdwg.mxu0
        %1105 = vmatprep.subr.mxu0 0.0
        %1106 = vmatpush1.msra.mxu0 %v965
        %1107 = vmatprep.subr.mxu0 0.0
        %1108 = vmatpush1.msra.mxu0 %v970
        %1109 = vmatprep.subr.mxu0 0.0
        %1110 = vmatpush1.msra.mxu0 %v975
        %1111 = vmatprep.subr.mxu0 0.0
        %1112 = vmatpush1.msra.mxu0 %v980
        %1113 = vmatprep.subr.mxu0 0.0
        %1114 = vmatpush1.msra.mxu0 0.0
        %1115 = vmatprep.subr.mxu0 0.0
        %1116 = vmatpush1.msra.mxu0 0.0
        %1117 = vmatprep.subr.mxu0 0.0
        %1118 = vmatpush1.msra.mxu0 0.0
        %1119 = vmatprep.subr.mxu0 0.0
        %1120 = vmatpush1.msra.mxu0 0.0
        %1121 = vmatprep.subr.mxu0 0.0
        %1122 = vmatpush1.msra.mxu0 0.0
        %1123 = vmatprep.subr.mxu0 0.0
        %1124 = vmatpush1.msra.mxu0 0.0
        %1125 = vmatprep.subr.mxu0 0.0
        %1126 = vmatpush1.msra.mxu0 0.0
        %1127 = vmatprep.subr.mxu0 0.0
        %1128 = vmatpush1.msra.mxu0 0.0
        %1129 = vmatprep.subr.mxu0 0.0
        %1130 = vmatpush1.msra.mxu0 0.0
        %1131 = vmatprep.subr.mxu0 0.0
        %1132 = vmatpush1.msra.mxu0 0.0
        %1133 = vmatprep.subr.mxu0 0.0
        %1134 = vmatpush1.msra.mxu0 0.0
        %1135 = vmatprep.subr.mxu0 0.0
        %1136 = vmatpush1.msra.mxu0 0.0
        %1137 = vmatprep.subr.mxu0 0.0
        %1138 = vmatpush1.msra.mxu0 0.0
        %1139 = vmatprep.subr.mxu0 0.0
        %1140 = vmatpush1.msra.mxu0 0.0
        %1141 = vmatprep.subr.mxu0 0.0
        %1142 = vmatpush1.msra.mxu0 0.0
        %1143 = vmatprep.subr.mxu0 0.0
        %1144 = vmatpush1.msra.mxu0 0.0
        %1145 = vmatprep.subr.mxu0 0.0
        %1146 = vmatpush1.msra.mxu0 0.0
        %1147 = vmatprep.subr.mxu0 0.0
        %1148 = vmatpush1.msra.mxu0 0.0
        %1149 = vmatprep.subr.mxu0 0.0
        %1150 = vmatpush1.msra.mxu0 0.0
        %1151 = vmatprep.subr.mxu0 0.0
        %1152 = vmatpush1.msra.mxu0 0.0
        %1153 = vmatprep.subr.mxu0 0.0
        %1154 = vmatpush1.msra.mxu0 0.0
        %1155 = vmatprep.subr.mxu0 0.0
        %1156 = vmatpush1.msra.mxu0 0.0
        %1157 = vmatprep.subr.mxu0 0.0
        %1158 = vmatpush1.msra.mxu0 0.0
        %1159 = vmatprep.subr.mxu0 0.0
        %1160 = vmatpush1.msra.mxu0 0.0
        %1161 = vmatprep.subr.mxu0 0.0
        %1162 = vmatpush1.msra.mxu0 0.0
        %1163 = vmatprep.subr.mxu0 0.0
        %1164 = vmatpush1.msra.mxu0 0.0
        %1165 = vmatprep.subr.mxu0 0.0
        %1166 = vmatpush1.msra.mxu0 0.0
        %1167 = vmatprep.subr.mxu0 0.0
        %1168 = vmatpush1.msra.mxu0 0.0
        %1169 = vmatprep.mubr.f32.mxu0 0.0
        %1170 = vmatmul.mubr.f32.gmra.mrb[0].mxu0 %v1025
        %v1171 = vpop.f32.mrb[0].mxu0
        %v1172 = vadd.f32 0.0, %v1171
        %v1173 = vpop.f32.mrb[0].mxu0
        %1174 = vmatprep.mubr.f32.mxu0 0.0
        %1175 = vmatmul.mubr.f32.gmra.mrb[0].mxu0 %v1028
        %v1176 = vpop.f32.mrb[0].mxu0
        %v1177 = vadd.f32 0.0, %v1176
        %v1178 = vpop.f32.mrb[0].mxu0
        %1179 = vdwg.mxu0
        %1180 = vmatprep.subr.mxu0 0.0
        %1181 = vmatpush1.msra.mxu0 %v985
        %1182 = vmatprep.subr.mxu0 0.0
        %1183 = vmatpush1.msra.mxu0 %v990
        %1184 = vmatprep.subr.mxu0 0.0
        %1185 = vmatpush1.msra.mxu0 %v995
        %1186 = vmatprep.subr.mxu0 0.0
        %1187 = vmatpush1.msra.mxu0 %v1000
        %1188 = vmatprep.subr.mxu0 0.0
        %1189 = vmatpush1.msra.mxu0 0.0
        %1190 = vmatprep.subr.mxu0 0.0
        %1191 = vmatpush1.msra.mxu0 0.0
        %1192 = vmatprep.subr.mxu0 0.0
        %1193 = vmatpush1.msra.mxu0 0.0
        %1194 = vmatprep.subr.mxu0 0.0
        %1195 = vmatpush1.msra.mxu0 0.0
        %1196 = vmatprep.subr.mxu0 0.0
        %1197 = vmatpush1.msra.mxu0 0.0
        %1198 = vmatprep.subr.mxu0 0.0
        %1199 = vmatpush1.msra.mxu0 0.0
        %1200 = vmatprep.subr.mxu0 0.0
        %1201 = vmatpush1.msra.mxu0 0.0
        %1202 = vmatprep.subr.mxu0 0.0
        %1203 = vmatpush1.msra.mxu0 0.0
        %1204 = vmatprep.subr.mxu0 0.0
        %1205 = vmatpush1.msra.mxu0 0.0
        %1206 = vmatprep.subr.mxu0 0.0
        %1207 = vmatpush1.msra.mxu0 0.0
        %1208 = vmatprep.subr.mxu0 0.0
        %1209 = vmatpush1.msra.mxu0 0.0
        %1210 = vmatprep.subr.mxu0 0.0
        %1211 = vmatpush1.msra.mxu0 0.0
        %1212 = vmatprep.subr.mxu0 0.0
        %1213 = vmatpush1.msra.mxu0 0.0
        %1214 = vmatprep.subr.mxu0 0.0
        %1215 = vmatpush1.msra.mxu0 0.0
        %1216 = vmatprep.subr.mxu0 0.0
        %1217 = vmatpush1.msra.mxu0 0.0
        %1218 = vmatprep.subr.mxu0 0.0
        %1219 = vmatpush1.msra.mxu0 0.0
        %1220 = vmatprep.subr.mxu0 0.0
        %1221 = vmatpush1.msra.mxu0 0.0
        %1222 = vmatprep.subr.mxu0 0.0
        %1223 = vmatpush1.msra.mxu0 0.0
        %1224 = vmatprep.subr.mxu0 0.0
        %1225 = vmatpush1.msra.mxu0 0.0
        %1226 = vmatprep.subr.mxu0 0.0
        %1227 = vmatpush1.msra.mxu0 0.0
        %1228 = vmatprep.subr.mxu0 0.0
        %1229 = vmatpush1.msra.mxu0 0.0
        %1230 = vmatprep.subr.mxu0 0.0
        %1231 = vmatpush1.msra.mxu0 0.0
        %1232 = vmatprep.subr.mxu0 0.0
        %1233 = vmatpush1.msra.mxu0 0.0
        %1234 = vmatprep.subr.mxu0 0.0
        %1235 = vmatpush1.msra.mxu0 0.0
        %1236 = vmatprep.subr.mxu0 0.0
        %1237 = vmatpush1.msra.mxu0 0.0
        %1238 = vmatprep.subr.mxu0 0.0
        %1239 = vmatpush1.msra.mxu0 0.0
        %1240 = vmatprep.subr.mxu0 0.0
        %1241 = vmatpush1.msra.mxu0 0.0
        %1242 = vmatprep.subr.mxu0 0.0
        %1243 = vmatpush1.msra.mxu0 0.0
        %1244 = vmatprep.mubr.f32.mxu0 0.0
        %1245 = vmatmul.mubr.f32.gmra.mrb[0].mxu0 %v1025
        %v1246 = vpop.f32.mrb[0].mxu0
        %v1247 = vadd.f32 0.0, %v1246
        %v1248 = vpop.f32.mrb[0].mxu0
        %1249 = vmatprep.mubr.f32.mxu0 0.0
        %1250 = vmatmul.mubr.f32.gmra.mrb[0].mxu0 %v1028
        %v1251 = vpop.f32.mrb[0].mxu0
        %v1252 = vadd.f32 0.0, %v1251
        %v1253 = vpop.f32.mrb[0].mxu0
        %1254 = vdwg.mxu0
        %1255 = vmatprep.subr.mxu0 0.0
        %1256 = vmatpush1.msra.mxu0 %v1005
        %1257 = vmatprep.subr.mxu0 0.0
        %1258 = vmatpush1.msra.mxu0 %v1010
        %1259 = vmatprep.subr.mxu0 0.0
        %1260 = vmatpush1.msra.mxu0 %v1015
        %1261 = vmatprep.subr.mxu0 0.0
        %1262 = vmatpush1.msra.mxu0 %v1020
        %1263 = vmatprep.subr.mxu0 0.0
        %1264 = vmatpush1.msra.mxu0 0.0
        %1265 = vmatprep.subr.mxu0 0.0
        %1266 = vmatpush1.msra.mxu0 0.0
        %1267 = vmatprep.subr.mxu0 0.0
        %1268 = vmatpush1.msra.mxu0 0.0
        %1269 = vmatprep.subr.mxu0 0.0
        %1270 = vmatpush1.msra.mxu0 0.0
        %1271 = vmatprep.subr.mxu0 0.0
        %1272 = vmatpush1.msra.mxu0 0.0
        %1273 = vmatprep.subr.mxu0 0.0
        %1274 = vmatpush1.msra.mxu0 0.0
        %1275 = vmatprep.subr.mxu0 0.0
        %1276 = vmatpush1.msra.mxu0 0.0
        %1277 = vmatprep.subr.mxu0 0.0
        %1278 = vmatpush1.msra.mxu0 0.0
        %1279 = vmatprep.subr.mxu0 0.0
        %1280 = vmatpush1.msra.mxu0 0.0
        %1281 = vmatprep.subr.mxu0 0.0
        %1282 = vmatpush1.msra.mxu0 0.0
        %1283 = vmatprep.subr.mxu0 0.0
        %1284 = vmatpush1.msra.mxu0 0.0
        %1285 = vmatprep.subr.mxu0 0.0
        %1286 = vmatpush1.msra.mxu0 0.0
        %1287 = vmatprep.subr.mxu0 0.0
        %1288 = vmatpush1.msra.mxu0 0.0
        %1289 = vmatprep.subr.mxu0 0.0
        %1290 = vmatpush1.msra.mxu0 0.0
        %1291 = vmatprep.subr.mxu0 0.0
        %1292 = vmatpush1.msra.mxu0 0.0
        %1293 = vmatprep.subr.mxu0 0.0
        %1294 = vmatpush1.msra.mxu0 0.0
        %1295 = vmatprep.subr.mxu0 0.0
        %1296 = vmatpush1.msra.mxu0 0.0
        %1297 = vmatprep.subr.mxu0 0.0
        %1298 = vmatpush1.msra.mxu0 0.0
        %1299 = vmatprep.subr.mxu0 0.0
        %1300 = vmatpush1.msra.mxu0 0.0
        %1301 = vmatprep.subr.mxu0 0.0
        %1302 = vmatpush1.msra.mxu0 0.0
        %1303 = vmatprep.subr.mxu0 0.0
        %1304 = vmatpush1.msra.mxu0 0.0
        %1305 = vmatprep.subr.mxu0 0.0
        %1306 = vmatpush1.msra.mxu0 0.0
        %1307 = vmatprep.subr.mxu0 0.0
        %1308 = vmatpush1.msra.mxu0 0.0
        %1309 = vmatprep.subr.mxu0 0.0
        %1310 = vmatpush1.msra.mxu0 0.0
        %1311 = vmatprep.subr.mxu0 0.0
        %1312 = vmatpush1.msra.mxu0 0.0
        %1313 = vmatprep.subr.mxu0 0.0
        %1314 = vmatpush1.msra.mxu0 0.0
        %1315 = vmatprep.subr.mxu0 0.0
        %1316 = vmatpush1.msra.mxu0 0.0
        %1317 = vmatprep.subr.mxu0 0.0
        %1318 = vmatpush1.msra.mxu0 0.0
        %1319 = vmatprep.mubr.f32.mxu0 0.0
        %1320 = vmatmul.mubr.f32.gmra.mrb[0].mxu0 %v1025
        %v1321 = vpop.f32.mrb[0].mxu0
        %v1322 = vadd.f32 0.0, %v1321
        %v1323 = vpop.f32.mrb[0].mxu0
        %1324 = vmatprep.mubr.f32.mxu0 0.0
        %1325 = vmatmul.mubr.f32.gmra.mrb[0].mxu0 %v1028
        %v1326 = vpop.f32.mrb[0].mxu0
        %v1327 = vadd.f32 0.0, %v1326
        %v1328 = vpop.f32.mrb[0].mxu0
        %1329 = vdwg.mxu0
        %v1330 = vmul.f32 %v1097, %v1097
        %v1331 = vmul.f32 %v1102, %v1102
        %v1332 = vmul.f32 %v1172, %v1172
        %v1333 = vmul.f32 %v1177, %v1177
        %v1334 = vmul.f32 %v1097, %v1172
        %v1335 = vmul.f32 %v1102, %v1177
        %v1336 = vsub.f32 %v1247, %v1330
        %v1337 = vsub.f32 %v1252, %v1331
        %v1338 = vsub.f32 %v1336, %v1332
        %v1339 = vsub.f32 %v1337, %v1333
        %v1340 = vsub.f32 %v1322, %v1334
        %v1341 = vsub.f32 %v1327, %v1335
        %v1342 = vmul.f32 %v1334, 2.0
        %v1343 = vmul.f32 %v1335, 2.0
        %v1344 = vadd.f32 %v1342, 0.0001
        %v1345 = vadd.f32 %v1343, 0.0001
        %v1346 = vmul.f32 %v1340, 2.0
        %v1347 = vmul.f32 %v1341, 2.0
        %v1348 = vadd.f32 %v1346, 0.0009
        %v1349 = vadd.f32 %v1347, 0.0009
        %v1350 = vmul.f32 %v1344, %v1348
        %v1351 = vmul.f32 %v1345, %v1349
        %v1352 = vadd.f32 %v1330, %v1332
        %v1353 = vadd.f32 %v1331, %v1333
        %v1354 = vadd.f32 %v1352, 0.0001
        %v1355 = vadd.f32 %v1353, 0.0001
        %v1356 = vadd.f32 %v1338, 0.0009
        %v1357 = vadd.f32 %v1339, 0.0009
        %v1358 = vmul.f32 %v1354, %v1356
        %v1359 = vmul.f32 %v1355, %v1357
        %v1360 = vrcp.pop %v1358
        %v1361 = vrcp.pop %v1359
        %v1362 = vmul.f32 %v1358, %v1360
        %v1363 = vmul.f32 %v1359, %v1361
        %v1364 = vsub.f32 2.0, %v1362
        %v1365 = vsub.f32 2.0, %v1363
        %v1366 = vmul.f32 %v1360, %v1364
        %v1367 = vmul.f32 %v1361, %v1365
        %v1368 = vmul.f32 %v1350, %v1366
        %v1369 = vmul.f32 %v1351, %v1367
        %v1370 = vmul.f32 %v1368, %v779
        %v1371 = vmul.f32 %v1369, %v780
        %v1372 = vsel %vm787, %v1370, 0.0
        %v1373 = vsel %vm787, %v1371, 0.0
        %v1374 = vadd.f32 %v1372, %v1373
        %1375 = vadd.xlane.f32.xlu0 %v1374
        %v1376 = vpop.xlane.xlu0 %1375
        %v1377 = vrot.slane %v1376, 4
        %v1378 = vadd.f32 %v1376, %v1377
        %v1379 = vrot.slane %v1378, 2
        %v1380 = vadd.f32 %v1378, %v1379
        %v1381 = vrot.slane %v1380, 1
        %v1382 = vadd.f32 %v1380, %v1381
        %s1383 = vtos %v1382
        %v1384 = vstv %s799
        %1385 = vst [vmem:[%s741] sm:$0x1] %v1384
        %v1386 = vstv %s1383
        %1387 = vst [vmem:[%s747] sm:$0x1] %v1386
        %s1388 = sand.u32 %s354, 1
        %s1389 = scalar_lea.sflag [#allocation4], %s1388
        %s1390 = sand.u32 %s354, 1
        %s1391 = scalar_lea.vmem [#allocation16], %s1390
        %s1392 = sand.u32 %s384, 1
        %s1393 = scalar_lea.sflag [#allocation18], %s1392
        %s1394 = sand.u32 %s384, 1
        %s1395 = scalar_lea.vmem [#allocation17], %s1394
        // Predicated region
        $region89: #{tpu_custom_call.1} parent=55 // pred_check
          %p1396 = pneg %p364
        $region90: #{tpu_custom_call.1} parent=55 // pred_check_branch
          %1398 = sbr.rel (%p1396) target = $region92
        $region91: #{tpu_custom_call.1} parent=55 // pred_region
          %s1399 = sadd.s32 %s47, %s48
          %s1401 = ssub.s32 16, 16
          %1402 = vsyncadd %s1389, %s1401
          %s1403 = smul.addr %s46, 3
          %s1404 = sadd.s32 %s1399, %s1403
          %s1405 = smul.addr %s1404, 16
          %s1406 = scalar_lea.hbm %s9, %s1405
          %s1408 = sshll.u32 %s1391, 4
          %s1409 = int_to_ptr.vmem [resolvable:$true] %s1408
          %1411 = dma.vmem_to_hbm [thread:$0]  %s1409, 16, %s1406, %s1389
        $region92: #{tpu_custom_call.1} parent=55 // pred_fallthru
          _
        // Predicated region
        $region93: #{tpu_custom_call.1} parent=55 // pred_check
          %p1412 = pneg %p394
        $region94: #{tpu_custom_call.1} parent=55 // pred_check_branch
          %1414 = sbr.rel (%p1412) target = $region96
        $region95: #{tpu_custom_call.1} parent=55 // pred_region
          %s1415 = sadd.s32 %s47, %s48
          %s1417 = ssub.s32 16, 16
          %1418 = vsyncadd %s1393, %s1417
          %s1419 = smul.addr %s46, 3
          %s1420 = sadd.s32 %s1415, %s1419
          %s1421 = smul.addr %s1420, 16
          %s1422 = scalar_lea.hbm %s10, %s1421
          %s1424 = sshll.u32 %s1395, 4
          %s1425 = int_to_ptr.vmem [resolvable:$true] %s1424
          %1427 = dma.vmem_to_hbm [thread:$0]  %s1425, 16, %s1422, %s1393
        $region96: #{tpu_custom_call.1} parent=55 // pred_fallthru
          _
      $region56: #{tpu_custom_call.1} parent=5 // pred_fallthru
        _
      %p1428 = scmp.le.s32.totalorder 2, %s36
      // Predicated region
      $region97: #{tpu_custom_call.1} parent=5 // pred_check
        %p1429 = pneg %p1428
      $region98: #{tpu_custom_call.1} parent=5 // pred_check_branch
        %1431 = sbr.rel (%p1429) target = $region100
      $region99: #{tpu_custom_call.1} parent=5 // pred_region
        %s1432 = ssub.s32 %s36, 2
        // Predicated region
        $region101: #{tpu_custom_call.1} parent=99 // pred_check
          %p1433 = pneg %p370
        $region102: #{tpu_custom_call.1} parent=99 // pred_check_branch
          %1435 = sbr.rel (%p1433) target = $region104
        $region103: #{tpu_custom_call.1} parent=99 // pred_region
          %s1436 = sand.u32 %s355, 1
          %s1437 = scalar_lea.sflag [#allocation4], %s1436
          %s1438 = sand.u32 %s355, 1
          %s1439 = scalar_lea.vmem [#allocation16], %s1438
          %1440 = dma.done %s1437, 16
        $region104: #{tpu_custom_call.1} parent=99 // pred_fallthru
          _
        // Predicated region
        $region105: #{tpu_custom_call.1} parent=99 // pred_check
          %p1441 = pneg %p400
        $region106: #{tpu_custom_call.1} parent=99 // pred_check_branch
          %1443 = sbr.rel (%p1441) target = $region108
        $region107: #{tpu_custom_call.1} parent=99 // pred_region
          %s1444 = sand.u32 %s385, 1
          %s1445 = scalar_lea.sflag [#allocation18], %s1444
          %s1446 = sand.u32 %s385, 1
          %s1447 = scalar_lea.vmem [#allocation17], %s1446
          %1448 = dma.done %s1445, 16
        $region108: #{tpu_custom_call.1} parent=99 // pred_fallthru
          _
      $region100: #{tpu_custom_call.1} parent=5 // pred_fallthru
        _
    $region6: #{tpu_custom_call.1} parent=1 // loop_footer
      %s40 = sadd.s32 1, %s36
    $region7: #{tpu_custom_call.1} parent=1 // loop_footer_branch
      %35 = sbr.rel target = $region3
    $region8: #{tpu_custom_call.1} parent=1 // loop_exit
      _
    %1449 = vsyncpa [#allocation3], 1
    %s1450 = scalar_lea.sflag [#allocation3], 1
    %1451 = vsyncpa %s1450, 1
    %1452 = vsyncpa [#allocation6], 1
    %s1453 = scalar_lea.sflag [#allocation6], 1
    %1454 = vsyncpa %s1453, 1
    %1455 = vsyncpa [#allocation9], 1
    %s1456 = scalar_lea.sflag [#allocation9], 1
    %1457 = vsyncpa %s1456, 1
    %1458 = vsyncpa [#allocation12], 1
    %s1459 = scalar_lea.sflag [#allocation12], 1
    %1460 = vsyncpa %s1459, 1
    %1461 = vsyncpa [#allocation15], 1
    %1462 = vsyncpa [#allocation4], 1
    %s1463 = scalar_lea.sflag [#allocation4], 1
    %1464 = vsyncpa %s1463, 1
    %1465 = vsyncpa [#allocation18], 1
    %s1466 = scalar_lea.sflag [#allocation18], 1
    %1467 = vsyncpa %s1466, 1

</llo_original>
